<compile_context>
chip_gen: v7x
topology: tpu7x:2x2x1
jax: 0.10.0
libtpu: 0.0.40
codegen_flags: <defaults>
</compile_context>

<pallas_src>
import functools

import jax
import jax.numpy as jnp
from jax.experimental import pallas as pl
from jax.experimental.pallas import tpu as pltpu

D_MODEL = 32
N_HEAD = 4
HEAD_DIM = D_MODEL // N_HEAD
MLP_DIM = 4 * D_MODEL
EPS = 1e-5  # nn.LayerNorm default


def _layernorm_f32(x, w, b):
    xf = x.astype(jnp.float32)
    mean = jnp.mean(xf, axis=-1, keepdims=True)
    var = jnp.mean(jnp.square(xf - mean), axis=-1, keepdims=True)
    return (xf - mean) * jax.lax.rsqrt(var + EPS) * w + b


def _linear(x_f32, w_ref, b_ref):
    """x @ W.T + b (PyTorch Linear convention, W is (out, in)); f32 accumulation."""
    w = w_ref[...]
    y = jax.lax.dot_general(x_f32.astype(w.dtype), w,
                            (((1,), (1,)), ((), ())),
                            preferred_element_type=jnp.float32)
    return y + b_ref[...]


def residual_block_kernel(x_ref,
                          ln1_w_ref, ln1_b_ref,
                          in_w_ref, in_b_ref,
                          out_w_ref, out_b_ref,
                          ln2_w_ref, ln2_b_ref,
                          fc_w_ref, fc_b_ref,
                          proj_w_ref, proj_b_ref,
                          y_ref, attn_w_ref,
                          *, n_head, matmul_dtype):
    L, D = x_ref.shape                     # one batch element: (L, D) rows
    H = n_head
    Dh = D // H
    scale = 1.0 / float(Dh) ** 0.5

    x = x_ref[...].astype(jnp.float32)                      # (L, D)

    # ---- ln_1 (f32 elementwise) ----
    xln = _layernorm_f32(x, ln1_w_ref[...], ln1_b_ref[...])

    # ---- fused qkv projection: one (L, D) x (D, 3D) MXU pass ----
    qkv = _linear(xln, in_w_ref, in_b_ref)                   # (L, 3D) f32

    # ---- head split: H static lane slices + one stack per tensor ----
    # (count is batch-invariant: batch is a grid axis, not a Python loop)
    q = jnp.stack([qkv[:, h * Dh:(h + 1) * Dh] for h in range(H)])            # (H, L, Dh)
    k = jnp.stack([qkv[:, D + h * Dh:D + (h + 1) * Dh] for h in range(H)])
    v = jnp.stack([qkv[:, 2 * D + h * Dh:2 * D + (h + 1) * Dh] for h in range(H)])

    # ---- all heads in one batched score matmul + exact softmax (f32) ----
    s = jnp.einsum('hld,hmd->hlm',
                   q.astype(matmul_dtype), k.astype(matmul_dtype),
                   preferred_element_type=jnp.float32) * scale               # (H, L, L)
    s = s - jnp.max(s, axis=-1, keepdims=True)
    e = jnp.exp(s)
    p = e / jnp.sum(e, axis=-1, keepdims=True)   # exact divide: p also feeds attn_w output

    o = jnp.einsum('hlm,hmd->hld',
                   p.astype(matmul_dtype), v.astype(matmul_dtype),
                   preferred_element_type=jnp.float32)                        # (H, L, Dh)

    # ---- merge heads (one concat), single out-projection ----
    ctx = jnp.concatenate([o[h] for h in range(H)], axis=-1)                  # (L, D)
    attn_out = _linear(ctx, out_w_ref, out_b_ref)

    # ---- first residual, ln_2, MLP (QuickGELU), second residual ----
    x1 = x + attn_out
    x2 = _layernorm_f32(x1, ln2_w_ref[...], ln2_b_ref[...])
    h1 = _linear(x2, fc_w_ref, fc_b_ref)                                      # (L, 4D)
    h1 = h1 * jax.nn.sigmoid(1.702 * h1)                                      # QuickGELU (f32)
    mlp = _linear(h1, proj_w_ref, proj_b_ref)                                 # (L, D)

    # ---- stores (2-D slabs) ----
    y_ref[...] = (x1 + mlp).astype(y_ref.dtype)                               # (L, D)
    attn_w_ref[...] = jnp.mean(p, axis=0).astype(attn_w_ref.dtype)            # head-avg (L, L)


def residual_attention_block(x_lnd, params, *, n_head=N_HEAD,
                             matmul_dtype=jnp.bfloat16):
    """x_lnd: (L, N, D) float32, PyTorch seq-first convention (batch_first=False)."""
    L, N, D = x_lnd.shape

    # Batch-major inside the kernel: one cheap XLA transpose in/out so each grid
    # program owns a contiguous (L, D) tile (contiguous DMA, no in-kernel gather).
    x_flat = jnp.transpose(x_lnd, (1, 0, 2)).reshape(N * L, D)

    cast_w = lambda w: w.astype(matmul_dtype)   # bf16 weights: half VMEM / DMA bytes
    args = (x_flat,
            params['ln1_w'], params['ln1_b'],
            cast_w(params['in_w']), params['in_b'],
            cast_w(params['out_w']), params['out_b'],
            params['ln2_w'], params['ln2_b'],
            cast_w(params['fc_w']), params['fc_b'],
            cast_w(params['proj_w']), params['proj_b'])

    in_specs = [pl.BlockSpec((L, D), lambda n: (n, 0))]          # per-batch row tile
    in_specs += [pl.BlockSpec(a.shape, lambda n: (0, 0)) for a in args[1:]]  # resident weights

    kernel = functools.partial(residual_block_kernel,
                               n_head=n_head, matmul_dtype=matmul_dtype)

    y_flat, attn_flat = pl.pallas_call(
        kernel,
        grid=(N,),
        out_shape=(jax.ShapeDtypeStruct((N * L, D), x_lnd.dtype),
                   jax.ShapeDtypeStruct((N * L, L), jnp.float32)),
        in_specs=in_specs,
        out_specs=(pl.BlockSpec((L, D), lambda n: (n, 0)),
                   pl.BlockSpec((L, L), lambda n: (n, 0))),
        compiler_params=pltpu.CompilerParams(
            dimension_semantics=("parallel",)),   # v7x: 2 TensorCores; harmless elsewhere
    )(*args)

    # Free reshapes / one transpose back to the module's output conventions.
    y = jnp.transpose(y_flat.reshape(N, L, D), (1, 0, 2))        # (L, N, D)
    attn_w = attn_flat.reshape(N, L, L)                          # (N, L, L), head-averaged
    return y, attn_w


def make_params(key):
    ks = jax.random.split(key, 8)
    d, m = D_MODEL, MLP_DIM
    return {
        # LayerNorm / bias params are (1, dim) 2-D arrays for a clean VMEM layout.
        'ln1_w': jnp.ones((1, d), jnp.float32),
        'ln1_b': jnp.zeros((1, d), jnp.float32),
        'ln2_w': jnp.ones((1, d), jnp.float32),
        'ln2_b': jnp.zeros((1, d), jnp.float32),
        'in_w': 0.05 * jax.random.normal(ks[0], (3 * d, d), jnp.float32),
        'in_b': 0.05 * jax.random.normal(ks[1], (1, 3 * d), jnp.float32),
        'out_w': 0.05 * jax.random.normal(ks[2], (d, d), jnp.float32),
        'out_b': 0.05 * jax.random.normal(ks[3], (1, d), jnp.float32),
        'fc_w': 0.05 * jax.random.normal(ks[4], (m, d), jnp.float32),
        'fc_b': 0.05 * jax.random.normal(ks[5], (1, m), jnp.float32),
        'proj_w': 0.05 * jax.random.normal(ks[6], (d, m), jnp.float32),
        'proj_b': 0.05 * jax.random.normal(ks[7], (1, d), jnp.float32),
    }


def reference_forward(x_lnd, p):
    """Pure-JAX reference mirroring the PyTorch module (for verification)."""
    def ln(x, w, b):
        mean = jnp.mean(x, axis=-1, keepdims=True)
        var = jnp.mean((x - mean) ** 2, axis=-1, keepdims=True)
        return (x - mean) / jnp.sqrt(var + EPS) * w[0] + b[0]

    L, N, D = x_lnd.shape
    x = jnp.transpose(x_lnd, (1, 0, 2))          # (N, L, D)
    xln = ln(x, p['ln1_w'], p['ln1_b'])
    qkv = jnp.einsum('nld,ed->nle', xln, p['in_w']) + p['in_b'][0]
    q, k, v = jnp.split(qkv, 3, axis=-1)
    qh = q.reshape(N, L, N_HEAD, HEAD_DIM).transpose(0, 2, 1, 3)
    kh = k.reshape(N, L, N_HEAD, HEAD_DIM).transpose(0, 2, 1, 3)
    vh = v.reshape(N, L, N_HEAD, HEAD_DIM).transpose(0, 2, 1, 3)
    s = jnp.einsum('nhld,nhmd->nhlm', qh, kh) / (HEAD_DIM ** 0.5)
    w = jax.nn.softmax(s, axis=-1)
    o = jnp.einsum('nhlm,nhmd->nhld', w, vh)
    o = o.transpose(0, 2, 1, 3).reshape(N, L, D)
    attn_out = jnp.einsum('nld,ed->nle', o, p['out_w']) + p['out_b'][0]
    x1 = x + attn_out
    x2 = ln(x1, p['ln2_w'], p['ln2_b'])
    h = jnp.einsum('nld,ed->nle', x2, p['fc_w']) + p['fc_b'][0]
    h = h * jax.nn.sigmoid(1.702 * h)
    mlp_out = jnp.einsum('nle,de->nld', h, p['proj_w']) + p['proj_b'][0]
    y = x1 + mlp_out
    return jnp.transpose(y, (1, 0, 2)), jnp.mean(w, axis=1)


if __name__ == "__main__":
    key = jax.random.PRNGKey(0)
    k_x, k_p = jax.random.split(key)

    L, N = 8, 2                                   # seq=8, batch=2, d_model=32
    x = jax.random.normal(k_x, (L, N, D_MODEL), jnp.float32)
    params = make_params(k_p)

    y_ref, attn_w_ref = reference_forward(x, params)

    # f32 MXU path: tight numerical check (exact softmax, f32 everywhere).
    y32, w32 = jax.jit(functools.partial(residual_attention_block,
                                         matmul_dtype=jnp.float32))(x, params)
    y32 = jax.block_until_ready(y32)
    w32 = jax.block_until_ready(w32)
    assert y32.shape == (L, N, D_MODEL)
    assert w32.shape == (N, L, L)
    assert jnp.allclose(y32, y_ref, atol=1e-4, rtol=1e-4)
    assert jnp.allclose(w32, attn_w_ref, atol=1e-5, rtol=1e-4)

    # Default bf16 MXU path (native on v5e/v6e/v7x MXUs), f32 accumulation.
    y16, w16 = jax.jit(residual_attention_block)(x, params)
    y16 = jax.block_until_ready(y16)
    w16 = jax.block_until_ready(w16)
    assert jnp.allclose(y16, y_ref, atol=2e-2, rtol=2e-2)
    assert jnp.allclose(w16, attn_w_ref, atol=2e-2, rtol=2e-2)

    print("KERNEL_OK")
</pallas_src>

<mosaic_0001>
module attributes {stable_mosaic.version = 11 : i64} {
  func.func @residual_block_kernel(%arg0: i32, %arg1: memref<8x32xf32, #tpu.memory_space<vmem>>, %arg2: memref<1x32xf32, #tpu.memory_space<vmem>>, %arg3: memref<1x32xf32, #tpu.memory_space<vmem>>, %arg4: memref<96x32xf32, #tpu.memory_space<vmem>>, %arg5: memref<1x96xf32, #tpu.memory_space<vmem>>, %arg6: memref<32x32xf32, #tpu.memory_space<vmem>>, %arg7: memref<1x32xf32, #tpu.memory_space<vmem>>, %arg8: memref<1x32xf32, #tpu.memory_space<vmem>>, %arg9: memref<1x32xf32, #tpu.memory_space<vmem>>, %arg10: memref<128x32xf32, #tpu.memory_space<vmem>>, %arg11: memref<1x128xf32, #tpu.memory_space<vmem>>, %arg12: memref<32x128xf32, #tpu.memory_space<vmem>>, %arg13: memref<1x32xf32, #tpu.memory_space<vmem>>, %arg14: memref<8x32xf32, #tpu.memory_space<vmem>>, %arg15: memref<8x8xf32, #tpu.memory_space<vmem>>) attributes {dimension_semantics = [#tpu.dimension_semantics<parallel>], iteration_bounds = array<i64: 2>, scalar_prefetch = 0 : i64, scratch_operands = 0 : i64, tpu.core_type = #tpu.core_type<tc>, window_params = [{transform_indices = @transform_0, window_bounds = array<i64: 8, 32>}, {pipeline_mode = #tpu.pipeline_mode<synchronous>, transform_indices = @transform_1, window_bounds = array<i64: 1, 32>}, {pipeline_mode = #tpu.pipeline_mode<synchronous>, transform_indices = @transform_2, window_bounds = array<i64: 1, 32>}, {pipeline_mode = #tpu.pipeline_mode<synchronous>, transform_indices = @transform_3, window_bounds = array<i64: 96, 32>}, {pipeline_mode = #tpu.pipeline_mode<synchronous>, transform_indices = @transform_4, window_bounds = array<i64: 1, 96>}, {pipeline_mode = #tpu.pipeline_mode<synchronous>, transform_indices = @transform_5, window_bounds = array<i64: 32, 32>}, {pipeline_mode = #tpu.pipeline_mode<synchronous>, transform_indices = @transform_6, window_bounds = array<i64: 1, 32>}, {pipeline_mode = #tpu.pipeline_mode<synchronous>, transform_indices = @transform_7, window_bounds = array<i64: 1, 32>}, {pipeline_mode = #tpu.pipeline_mode<synchronous>, transform_indices = @transform_8, window_bounds = array<i64: 1, 32>}, {pipeline_mode = #tpu.pipeline_mode<synchronous>, transform_indices = @transform_9, window_bounds = array<i64: 128, 32>}, {pipeline_mode = #tpu.pipeline_mode<synchronous>, transform_indices = @transform_10, window_bounds = array<i64: 1, 128>}, {pipeline_mode = #tpu.pipeline_mode<synchronous>, transform_indices = @transform_11, window_bounds = array<i64: 32, 128>}, {pipeline_mode = #tpu.pipeline_mode<synchronous>, transform_indices = @transform_12, window_bounds = array<i64: 1, 32>}, {transform_indices = @transform_13, window_bounds = array<i64: 8, 32>}, {transform_indices = @transform_14, window_bounds = array<i64: 8, 8>}]} {
    %c0 = arith.constant 0 : index
    %c0_0 = arith.constant 0 : index
    %0 = vector.load %arg1[%c0, %c0_0] : memref<8x32xf32, #tpu.memory_space<vmem>>, vector<8x32xf32>
    %c0_1 = arith.constant 0 : index
    %c0_2 = arith.constant 0 : index
    %1 = vector.load %arg2[%c0_1, %c0_2] : memref<1x32xf32, #tpu.memory_space<vmem>>, vector<1x32xf32>
    %c0_3 = arith.constant 0 : index
    %c0_4 = arith.constant 0 : index
    %2 = vector.load %arg3[%c0_3, %c0_4] : memref<1x32xf32, #tpu.memory_space<vmem>>, vector<1x32xf32>
    %cst = arith.constant dense<0.000000e+00> : vector<8xf32>
    %3 = vector.multi_reduction <add>, %0, %cst [1] : vector<8x32xf32> to vector<8xf32>
    %4 = vector.shape_cast %3 : vector<8xf32> to vector<8x1xf32>
    %cst_5 = arith.constant 3.200000e+01 : f32
    %5 = vector.broadcast %cst_5 : f32 to vector<8x1xf32>
    %6 = arith.divf %4, %5 : vector<8x1xf32>
    %7 = vector.broadcast %6 : vector<8x1xf32> to vector<8x32xf32>
    %8 = arith.subf %0, %7 : vector<8x32xf32>
    %9 = arith.mulf %8, %8 : vector<8x32xf32>
    %cst_6 = arith.constant dense<0.000000e+00> : vector<8xf32>
    %10 = vector.multi_reduction <add>, %9, %cst_6 [1] : vector<8x32xf32> to vector<8xf32>
    %11 = vector.shape_cast %10 : vector<8xf32> to vector<8x1xf32>
    %cst_7 = arith.constant 3.200000e+01 : f32
    %12 = vector.broadcast %cst_7 : f32 to vector<8x1xf32>
    %13 = arith.divf %11, %12 : vector<8x1xf32>
    %14 = vector.broadcast %6 : vector<8x1xf32> to vector<8x32xf32>
    %15 = arith.subf %0, %14 : vector<8x32xf32>
    %cst_8 = arith.constant 9.99999974E-6 : f32
    %16 = vector.broadcast %cst_8 : f32 to vector<8x1xf32>
    %17 = arith.addf %13, %16 : vector<8x1xf32>
    %18 = math.rsqrt %17 : vector<8x1xf32>
    %19 = vector.broadcast %18 : vector<8x1xf32> to vector<8x32xf32>
    %20 = arith.mulf %15, %19 : vector<8x32xf32>
    %21 = vector.broadcast %1 : vector<1x32xf32> to vector<8x32xf32>
    %22 = arith.mulf %20, %21 : vector<8x32xf32>
    %23 = vector.broadcast %2 : vector<1x32xf32> to vector<8x32xf32>
    %24 = arith.addf %22, %23 : vector<8x32xf32>
    %c0_9 = arith.constant 0 : index
    %c0_10 = arith.constant 0 : index
    %25 = vector.load %arg4[%c0_9, %c0_10] : memref<96x32xf32, #tpu.memory_space<vmem>>, vector<96x32xf32>
    %cst_11 = arith.constant dense<0.000000e+00> : vector<8x96xf32>
    %26 = tpu.matmul %24, %25, %cst_11 {dimension_numbers = #tpu.dot_dimension_numbers<[1], [1], [0], [0], [0, 0, 1, 0], [], []>} : vector<8x32xf32>, vector<96x32xf32>, vector<8x96xf32> -> vector<8x96xf32>
    %c0_12 = arith.constant 0 : index
    %c0_13 = arith.constant 0 : index
    %27 = vector.load %arg5[%c0_12, %c0_13] : memref<1x96xf32, #tpu.memory_space<vmem>>, vector<1x96xf32>
    %28 = vector.broadcast %27 : vector<1x96xf32> to vector<8x96xf32>
    %29 = arith.addf %26, %28 : vector<8x96xf32>
    %30 = vector.extract_strided_slice %29 {offsets = [0, 0], sizes = [8, 8], strides = [1, 1]} : vector<8x96xf32> to vector<8x8xf32>
    %31 = vector.extract_strided_slice %29 {offsets = [0, 8], sizes = [8, 8], strides = [1, 1]} : vector<8x96xf32> to vector<8x8xf32>
    %32 = vector.extract_strided_slice %29 {offsets = [0, 16], sizes = [8, 8], strides = [1, 1]} : vector<8x96xf32> to vector<8x8xf32>
    %33 = vector.extract_strided_slice %29 {offsets = [0, 24], sizes = [8, 8], strides = [1, 1]} : vector<8x96xf32> to vector<8x8xf32>
    %34 = vector.shape_cast %30 : vector<8x8xf32> to vector<1x8x8xf32>
    %35 = vector.shape_cast %31 : vector<8x8xf32> to vector<1x8x8xf32>
    %36 = vector.shape_cast %32 : vector<8x8xf32> to vector<1x8x8xf32>
    %37 = vector.shape_cast %33 : vector<8x8xf32> to vector<1x8x8xf32>
    %38 = tpu.concatenate %34, %35, %36, %37 in 0 : vector<1x8x8xf32>, vector<1x8x8xf32>, vector<1x8x8xf32>, vector<1x8x8xf32> -> vector<4x8x8xf32>
    %39 = vector.extract_strided_slice %29 {offsets = [0, 32], sizes = [8, 8], strides = [1, 1]} : vector<8x96xf32> to vector<8x8xf32>
    %40 = vector.extract_strided_slice %29 {offsets = [0, 40], sizes = [8, 8], strides = [1, 1]} : vector<8x96xf32> to vector<8x8xf32>
    %41 = vector.extract_strided_slice %29 {offsets = [0, 48], sizes = [8, 8], strides = [1, 1]} : vector<8x96xf32> to vector<8x8xf32>
    %42 = vector.extract_strided_slice %29 {offsets = [0, 56], sizes = [8, 8], strides = [1, 1]} : vector<8x96xf32> to vector<8x8xf32>
    %43 = vector.shape_cast %39 : vector<8x8xf32> to vector<1x8x8xf32>
    %44 = vector.shape_cast %40 : vector<8x8xf32> to vector<1x8x8xf32>
    %45 = vector.shape_cast %41 : vector<8x8xf32> to vector<1x8x8xf32>
    %46 = vector.shape_cast %42 : vector<8x8xf32> to vector<1x8x8xf32>
    %47 = tpu.concatenate %43, %44, %45, %46 in 0 : vector<1x8x8xf32>, vector<1x8x8xf32>, vector<1x8x8xf32>, vector<1x8x8xf32> -> vector<4x8x8xf32>
    %48 = vector.extract_strided_slice %29 {offsets = [0, 64], sizes = [8, 8], strides = [1, 1]} : vector<8x96xf32> to vector<8x8xf32>
    %49 = vector.extract_strided_slice %29 {offsets = [0, 72], sizes = [8, 8], strides = [1, 1]} : vector<8x96xf32> to vector<8x8xf32>
    %50 = vector.extract_strided_slice %29 {offsets = [0, 80], sizes = [8, 8], strides = [1, 1]} : vector<8x96xf32> to vector<8x8xf32>
    %51 = vector.extract_strided_slice %29 {offsets = [0, 88], sizes = [8, 8], strides = [1, 1]} : vector<8x96xf32> to vector<8x8xf32>
    %52 = vector.shape_cast %48 : vector<8x8xf32> to vector<1x8x8xf32>
    %53 = vector.shape_cast %49 : vector<8x8xf32> to vector<1x8x8xf32>
    %54 = vector.shape_cast %50 : vector<8x8xf32> to vector<1x8x8xf32>
    %55 = vector.shape_cast %51 : vector<8x8xf32> to vector<1x8x8xf32>
    %56 = tpu.concatenate %52, %53, %54, %55 in 0 : vector<1x8x8xf32>, vector<1x8x8xf32>, vector<1x8x8xf32>, vector<1x8x8xf32> -> vector<4x8x8xf32>
    "tpu.trace_start"() <{level = 10 : i32, message = "hld,hmd->hlm"}> : () -> ()
    %cst_14 = arith.constant dense<0.000000e+00> : vector<4x8x8xf32>
    %57 = tpu.matmul %38, %47, %cst_14 {dimension_numbers = #tpu.dot_dimension_numbers<[2], [2], [1], [1], [0, 0, 0, 1, 1, 1], [0], [0]>} : vector<4x8x8xf32>, vector<4x8x8xf32>, vector<4x8x8xf32> -> vector<4x8x8xf32>
    "tpu.trace_stop"() : () -> ()
    %cst_15 = arith.constant 0.353553385 : f32
    %58 = vector.broadcast %cst_15 : f32 to vector<4x8x8xf32>
    %59 = arith.mulf %57, %58 : vector<4x8x8xf32>
    %cst_16 = arith.constant dense<0xFF800000> : vector<4x8xf32>
    %60 = vector.multi_reduction <maximumf>, %59, %cst_16 [2] : vector<4x8x8xf32> to vector<4x8xf32>
    %61 = vector.shape_cast %60 : vector<4x8xf32> to vector<4x8x1xf32>
    %62 = vector.broadcast %61 : vector<4x8x1xf32> to vector<4x8x8xf32>
    %63 = arith.subf %59, %62 : vector<4x8x8xf32>
    %64 = math.exp %63 : vector<4x8x8xf32>
    %cst_17 = arith.constant dense<0.000000e+00> : vector<4x8xf32>
    %65 = vector.multi_reduction <add>, %64, %cst_17 [2] : vector<4x8x8xf32> to vector<4x8xf32>
    %66 = vector.shape_cast %65 : vector<4x8xf32> to vector<4x8x1xf32>
    %67 = vector.broadcast %66 : vector<4x8x1xf32> to vector<4x8x8xf32>
    %68 = arith.divf %64, %67 : vector<4x8x8xf32>
    "tpu.trace_start"() <{level = 10 : i32, message = "hlm,hmd->hld"}> : () -> ()
    %cst_18 = arith.constant dense<0.000000e+00> : vector<4x8x8xf32>
    %69 = tpu.matmul %68, %56, %cst_18 {dimension_numbers = #tpu.dot_dimension_numbers<[2], [1], [1], [2], [0, 0, 0, 1, 1, 2], [0], [0]>} : vector<4x8x8xf32>, vector<4x8x8xf32>, vector<4x8x8xf32> -> vector<4x8x8xf32>
    "tpu.trace_stop"() : () -> ()
    %70 = vector.extract_strided_slice %69 {offsets = [0, 0, 0], sizes = [1, 8, 8], strides = [1, 1, 1]} : vector<4x8x8xf32> to vector<1x8x8xf32>
    %71 = vector.shape_cast %70 : vector<1x8x8xf32> to vector<8x8xf32>
    %72 = vector.extract_strided_slice %69 {offsets = [1, 0, 0], sizes = [1, 8, 8], strides = [1, 1, 1]} : vector<4x8x8xf32> to vector<1x8x8xf32>
    %73 = vector.shape_cast %72 : vector<1x8x8xf32> to vector<8x8xf32>
    %74 = vector.extract_strided_slice %69 {offsets = [2, 0, 0], sizes = [1, 8, 8], strides = [1, 1, 1]} : vector<4x8x8xf32> to vector<1x8x8xf32>
    %75 = vector.shape_cast %74 : vector<1x8x8xf32> to vector<8x8xf32>
    %76 = vector.extract_strided_slice %69 {offsets = [3, 0, 0], sizes = [1, 8, 8], strides = [1, 1, 1]} : vector<4x8x8xf32> to vector<1x8x8xf32>
    %77 = vector.shape_cast %76 : vector<1x8x8xf32> to vector<8x8xf32>
    %78 = tpu.concatenate %71, %73, %75, %77 in 1 : vector<8x8xf32>, vector<8x8xf32>, vector<8x8xf32>, vector<8x8xf32> -> vector<8x32xf32>
    %c0_19 = arith.constant 0 : index
    %c0_20 = arith.constant 0 : index
    %79 = vector.load %arg6[%c0_19, %c0_20] : memref<32x32xf32, #tpu.memory_space<vmem>>, vector<32x32xf32>
    %cst_21 = arith.constant dense<0.000000e+00> : vector<8x32xf32>
    %80 = tpu.matmul %78, %79, %cst_21 {dimension_numbers = #tpu.dot_dimension_numbers<[1], [1], [0], [0], [0, 0, 1, 0], [], []>} : vector<8x32xf32>, vector<32x32xf32>, vector<8x32xf32> -> vector<8x32xf32>
    %c0_22 = arith.constant 0 : index
    %c0_23 = arith.constant 0 : index
    %81 = vector.load %arg7[%c0_22, %c0_23] : memref<1x32xf32, #tpu.memory_space<vmem>>, vector<1x32xf32>
    %82 = vector.broadcast %81 : vector<1x32xf32> to vector<8x32xf32>
    %83 = arith.addf %80, %82 : vector<8x32xf32>
    %84 = arith.addf %0, %83 : vector<8x32xf32>
    %c0_24 = arith.constant 0 : index
    %c0_25 = arith.constant 0 : index
    %85 = vector.load %arg8[%c0_24, %c0_25] : memref<1x32xf32, #tpu.memory_space<vmem>>, vector<1x32xf32>
    %c0_26 = arith.constant 0 : index
    %c0_27 = arith.constant 0 : index
    %86 = vector.load %arg9[%c0_26, %c0_27] : memref<1x32xf32, #tpu.memory_space<vmem>>, vector<1x32xf32>
    %cst_28 = arith.constant dense<0.000000e+00> : vector<8xf32>
    %87 = vector.multi_reduction <add>, %84, %cst_28 [1] : vector<8x32xf32> to vector<8xf32>
    %88 = vector.shape_cast %87 : vector<8xf32> to vector<8x1xf32>
    %cst_29 = arith.constant 3.200000e+01 : f32
    %89 = vector.broadcast %cst_29 : f32 to vector<8x1xf32>
    %90 = arith.divf %88, %89 : vector<8x1xf32>
    %91 = vector.broadcast %90 : vector<8x1xf32> to vector<8x32xf32>
    %92 = arith.subf %84, %91 : vector<8x32xf32>
    %93 = arith.mulf %92, %92 : vector<8x32xf32>
    %cst_30 = arith.constant dense<0.000000e+00> : vector<8xf32>
    %94 = vector.multi_reduction <add>, %93, %cst_30 [1] : vector<8x32xf32> to vector<8xf32>
    %95 = vector.shape_cast %94 : vector<8xf32> to vector<8x1xf32>
    %cst_31 = arith.constant 3.200000e+01 : f32
    %96 = vector.broadcast %cst_31 : f32 to vector<8x1xf32>
    %97 = arith.divf %95, %96 : vector<8x1xf32>
    %98 = vector.broadcast %90 : vector<8x1xf32> to vector<8x32xf32>
    %99 = arith.subf %84, %98 : vector<8x32xf32>
    %cst_32 = arith.constant 9.99999974E-6 : f32
    %100 = vector.broadcast %cst_32 : f32 to vector<8x1xf32>
    %101 = arith.addf %97, %100 : vector<8x1xf32>
    %102 = math.rsqrt %101 : vector<8x1xf32>
    %103 = vector.broadcast %102 : vector<8x1xf32> to vector<8x32xf32>
    %104 = arith.mulf %99, %103 : vector<8x32xf32>
    %105 = vector.broadcast %85 : vector<1x32xf32> to vector<8x32xf32>
    %106 = arith.mulf %104, %105 : vector<8x32xf32>
    %107 = vector.broadcast %86 : vector<1x32xf32> to vector<8x32xf32>
    %108 = arith.addf %106, %107 : vector<8x32xf32>
    %c0_33 = arith.constant 0 : index
    %c0_34 = arith.constant 0 : index
    %109 = vector.load %arg10[%c0_33, %c0_34] : memref<128x32xf32, #tpu.memory_space<vmem>>, vector<128x32xf32>
    %cst_35 = arith.constant dense<0.000000e+00> : vector<8x128xf32>
    %110 = tpu.matmul %108, %109, %cst_35 {dimension_numbers = #tpu.dot_dimension_numbers<[1], [1], [0], [0], [0, 0, 1, 0], [], []>} : vector<8x32xf32>, vector<128x32xf32>, vector<8x128xf32> -> vector<8x128xf32>
    %c0_36 = arith.constant 0 : index
    %c0_37 = arith.constant 0 : index
    %111 = vector.load %arg11[%c0_36, %c0_37] : memref<1x128xf32, #tpu.memory_space<vmem>>, vector<1x128xf32>
    %112 = vector.broadcast %111 : vector<1x128xf32> to vector<8x128xf32>
    %113 = arith.addf %110, %112 : vector<8x128xf32>
    %cst_38 = arith.constant 1.702000e+00 : f32
    %114 = vector.broadcast %cst_38 : f32 to vector<8x128xf32>
    %115 = arith.mulf %114, %113 : vector<8x128xf32>
    %116 = arith.negf %115 : vector<8x128xf32>
    %117 = math.exp %116 : vector<8x128xf32>
    %cst_39 = arith.constant 1.000000e+00 : f32
    %118 = vector.broadcast %cst_39 : f32 to vector<8x128xf32>
    %119 = arith.addf %118, %117 : vector<8x128xf32>
    %120 = arith.divf %118, %119 : vector<8x128xf32>
    %121 = arith.mulf %113, %120 : vector<8x128xf32>
    %c0_40 = arith.constant 0 : index
    %c0_41 = arith.constant 0 : index
    %122 = vector.load %arg12[%c0_40, %c0_41] : memref<32x128xf32, #tpu.memory_space<vmem>>, vector<32x128xf32>
    %cst_42 = arith.constant dense<0.000000e+00> : vector<8x32xf32>
    %123 = tpu.matmul %121, %122, %cst_42 {dimension_numbers = #tpu.dot_dimension_numbers<[1], [1], [0], [0], [0, 0, 1, 0], [], []>} : vector<8x128xf32>, vector<32x128xf32>, vector<8x32xf32> -> vector<8x32xf32>
    %c0_43 = arith.constant 0 : index
    %c0_44 = arith.constant 0 : index
    %124 = vector.load %arg13[%c0_43, %c0_44] : memref<1x32xf32, #tpu.memory_space<vmem>>, vector<1x32xf32>
    %125 = vector.broadcast %124 : vector<1x32xf32> to vector<8x32xf32>
    %126 = arith.addf %123, %125 : vector<8x32xf32>
    %127 = arith.addf %84, %126 : vector<8x32xf32>
    %c0_45 = arith.constant 0 : index
    %c0_46 = arith.constant 0 : index
    %128 = vector.load %arg14[%c0_45, %c0_46] : memref<8x32xf32, #tpu.memory_space<vmem>>, vector<8x32xf32>
    tpu.vector_store %arg14[%c0_45, %c0_46], %127 {strides = array<i32>} : memref<8x32xf32, #tpu.memory_space<vmem>>, vector<8x32xf32>,
    %cst_47 = arith.constant dense<0.000000e+00> : vector<8x8xf32>
    %129 = vector.multi_reduction <add>, %68, %cst_47 [0] : vector<4x8x8xf32> to vector<8x8xf32>
    %cst_48 = arith.constant 4.000000e+00 : f32
    %130 = vector.broadcast %cst_48 : f32 to vector<8x8xf32>
    %131 = arith.divf %129, %130 : vector<8x8xf32>
    %c0_49 = arith.constant 0 : index
    %c0_50 = arith.constant 0 : index
    %132 = vector.load %arg15[%c0_49, %c0_50] : memref<8x8xf32, #tpu.memory_space<vmem>>, vector<8x8xf32>
    tpu.vector_store %arg15[%c0_49, %c0_50], %131 {strides = array<i32>} : memref<8x8xf32, #tpu.memory_space<vmem>>, vector<8x8xf32>,
    return
  }
  func.func @transform_0(%arg0: i32) -> (i32, i32) {
    %c0_i32 = arith.constant 0 : i32
    %c0_i32_0 = arith.constant 0 : i32
    return %arg0, %c0_i32 : i32, i32
  }
  func.func @transform_1(%arg0: i32) -> (i32, i32) {
    %c0_i32 = arith.constant 0 : i32
    %c0_i32_0 = arith.constant 0 : i32
    %c0_i32_1 = arith.constant 0 : i32
    return %c0_i32, %c0_i32_0 : i32, i32
  }
  func.func @transform_2(%arg0: i32) -> (i32, i32) {
    %c0_i32 = arith.constant 0 : i32
    %c0_i32_0 = arith.constant 0 : i32
    %c0_i32_1 = arith.constant 0 : i32
    return %c0_i32, %c0_i32_0 : i32, i32
  }
  func.func @transform_3(%arg0: i32) -> (i32, i32) {
    %c0_i32 = arith.constant 0 : i32
    %c0_i32_0 = arith.constant 0 : i32
    %c0_i32_1 = arith.constant 0 : i32
    return %c0_i32, %c0_i32_0 : i32, i32
  }
  func.func @transform_4(%arg0: i32) -> (i32, i32) {
    %c0_i32 = arith.constant 0 : i32
    %c0_i32_0 = arith.constant 0 : i32
    %c0_i32_1 = arith.constant 0 : i32
    return %c0_i32, %c0_i32_0 : i32, i32
  }
  func.func @transform_5(%arg0: i32) -> (i32, i32) {
    %c0_i32 = arith.constant 0 : i32
    %c0_i32_0 = arith.constant 0 : i32
    %c0_i32_1 = arith.constant 0 : i32
    return %c0_i32, %c0_i32_0 : i32, i32
  }
  func.func @transform_6(%arg0: i32) -> (i32, i32) {
    %c0_i32 = arith.constant 0 : i32
    %c0_i32_0 = arith.constant 0 : i32
    %c0_i32_1 = arith.constant 0 : i32
    return %c0_i32, %c0_i32_0 : i32, i32
  }
  func.func @transform_7(%arg0: i32) -> (i32, i32) {
    %c0_i32 = arith.constant 0 : i32
    %c0_i32_0 = arith.constant 0 : i32
    %c0_i32_1 = arith.constant 0 : i32
    return %c0_i32, %c0_i32_0 : i32, i32
  }
  func.func @transform_8(%arg0: i32) -> (i32, i32) {
    %c0_i32 = arith.constant 0 : i32
    %c0_i32_0 = arith.constant 0 : i32
    %c0_i32_1 = arith.constant 0 : i32
    return %c0_i32, %c0_i32_0 : i32, i32
  }
  func.func @transform_9(%arg0: i32) -> (i32, i32) {
    %c0_i32 = arith.constant 0 : i32
    %c0_i32_0 = arith.constant 0 : i32
    %c0_i32_1 = arith.constant 0 : i32
    return %c0_i32, %c0_i32_0 : i32, i32
  }
  func.func @transform_10(%arg0: i32) -> (i32, i32) {
    %c0_i32 = arith.constant 0 : i32
    %c0_i32_0 = arith.constant 0 : i32
    %c0_i32_1 = arith.constant 0 : i32
    return %c0_i32, %c0_i32_0 : i32, i32
  }
  func.func @transform_11(%arg0: i32) -> (i32, i32) {
    %c0_i32 = arith.constant 0 : i32
    %c0_i32_0 = arith.constant 0 : i32
    %c0_i32_1 = arith.constant 0 : i32
    return %c0_i32, %c0_i32_0 : i32, i32
  }
  func.func @transform_12(%arg0: i32) -> (i32, i32) {
    %c0_i32 = arith.constant 0 : i32
    %c0_i32_0 = arith.constant 0 : i32
    %c0_i32_1 = arith.constant 0 : i32
    return %c0_i32, %c0_i32_0 : i32, i32
  }
  func.func @transform_13(%arg0: i32) -> (i32, i32) {
    %c0_i32 = arith.constant 0 : i32
    %c0_i32_0 = arith.constant 0 : i32
    return %arg0, %c0_i32 : i32, i32
  }
  func.func @transform_14(%arg0: i32) -> (i32, i32) {
    %c0_i32 = arith.constant 0 : i32
    %c0_i32_0 = arith.constant 0 : i32
    return %arg0, %c0_i32 : i32, i32
  }
}

</mosaic_0001>

<llo_original>
// kernel: residual_attention_block.1
$region0: #{residual_attention_block.1}
  #allocation0 [shape = 'u32[]', space=smem, size = 0x4, offset = 0x4, fixed_abs, tag = 'smem constant byte address 0x4 - core index']
  #allocation1 [shape = 'u32[144,128]{1,0:T(1,128)}', space=vmem, size = 0x12000, scoped, tag = 'internal scratch']
  %s0 = inlined_call_operand.vmem [shape: f32[16,32], index: 0, kind: input, shape index: {}]
  %s1 = inlined_call_operand.vmem [shape: f32[1,32], index: 1, kind: input, shape index: {}]
  %s2 = inlined_call_operand.vmem [shape: f32[1,32], index: 2, kind: input, shape index: {}]
  %s3 = inlined_call_operand.vmem [shape: f32[96,32], index: 3, kind: input, shape index: {}]
  %s4 = inlined_call_operand.vmem [shape: f32[1,96], index: 4, kind: input, shape index: {}]
  %s5 = inlined_call_operand.vmem [shape: f32[32,32], index: 5, kind: input, shape index: {}]
  %s6 = inlined_call_operand.vmem [shape: f32[1,32], index: 6, kind: input, shape index: {}]
  %s7 = inlined_call_operand.vmem [shape: f32[1,32], index: 7, kind: input, shape index: {}]
  %s8 = inlined_call_operand.vmem [shape: f32[1,32], index: 8, kind: input, shape index: {}]
  %s9 = inlined_call_operand.vmem [shape: f32[128,32], index: 9, kind: input, shape index: {}]
  %s10 = inlined_call_operand.vmem [shape: f32[1,128], index: 10, kind: input, shape index: {}]
  %s11 = inlined_call_operand.vmem [shape: f32[32,128], index: 11, kind: input, shape index: {}]
  %s12 = inlined_call_operand.vmem [shape: f32[1,32], index: 12, kind: input, shape index: {}]
  %s13 = inlined_call_operand.vmem [shape: f32[16,32], index: 13, kind: output, shape index: {0}]
  %s14 = inlined_call_operand.hbm [shape: f32[16,8], index: 14, kind: output, shape index: {1}]
  %15 = xla_tuple %s13, %s14
  %s16 = sld [smem:[#allocation0]]
  $region93: #{residual_attention_block.1} parent=0
    _
  %s18 = ssub.s32 1, %s16
  %s19 = scalar_select 0, %s18, %s16
  $region1: #{residual_attention_block.1} parent=0
    #allocation2 [shape = 'u8[8192]{0}', space=vmem, size = 0x2000, scoped, tag = 'output window, operand 1']
    #allocation3 [shape = 's32[2]{0}', space=sflag, size = 0x8, scoped, tag = 'scoped memory for residual_attention_block.1']
    %20 = vsyncpa [#allocation3], 0
    %s21 = scalar_lea.sflag [#allocation3], 1
    %22 = vsyncpa %s21, 0
    loop: start=0, step=1, limit=4
    $region2: #{residual_attention_block.1} parent=1 // loop_pre_header
      _
    $region3: #{residual_attention_block.1} parent=1 // loop_header
      %s24 = sphi 0, %s28
      %p25 = scmp.ge.s32.totalorder %s24, 4
      %s34 = sphi 0, %s36
      %s37 = sphi 0, %s34
      %s38 = sphi 0, %s37
      %s54 = sphi 0, %s38
      %s58 = sphi 0, %s58
      %s60 = sphi 0, %s58
      %s61 = sphi 0, %s60
      %s75 = sphi 0, %s61
      %s79 = sphi 0, %s79
      %s81 = sphi 0, %s79
      %s82 = sphi 0, %s81
      %s96 = sphi 0, %s82
      %s100 = sphi 0, %s100
      %s102 = sphi 0, %s100
      %s103 = sphi 0, %s102
      %s117 = sphi 0, %s103
      %s121 = sphi 0, %s121
      %s123 = sphi 0, %s121
      %s124 = sphi 0, %s123
      %s138 = sphi 0, %s124
      %s142 = sphi 0, %s142
      %s144 = sphi 0, %s142
      %s145 = sphi 0, %s144
      %s159 = sphi 0, %s145
      %s163 = sphi 0, %s163
      %s165 = sphi 0, %s163
      %s166 = sphi 0, %s165
      %s180 = sphi 0, %s166
      %s184 = sphi 0, %s184
      %s186 = sphi 0, %s184
      %s187 = sphi 0, %s186
      %s201 = sphi 0, %s187
      %s205 = sphi 0, %s205
      %s207 = sphi 0, %s205
      %s208 = sphi 0, %s207
      %s222 = sphi 0, %s208
      %s226 = sphi 0, %s226
      %s228 = sphi 0, %s226
      %s229 = sphi 0, %s228
      %s243 = sphi 0, %s229
      %s247 = sphi 0, %s247
      %s249 = sphi 0, %s247
      %s250 = sphi 0, %s249
      %s264 = sphi 0, %s250
      %s268 = sphi 0, %s268
      %s270 = sphi 0, %s268
      %s271 = sphi 0, %s270
      %s285 = sphi 0, %s271
      %s289 = sphi 0, %s289
      %s291 = sphi 0, %s289
      %s292 = sphi 0, %s291
      %s306 = sphi 0, %s292
      %s312 = sphi 0, %s314
      %s315 = sphi 0, %s312
      %s316 = sphi 0, %s315
      %s332 = sphi 0, %s316
      %s338 = sphi 0, %s340
      %s341 = sphi 0, %s338
      %s342 = sphi 0, %s341
      %s358 = sphi 0, %s342
    $region4: #{residual_attention_block.1} parent=1 // loop_header_branch
      %27 = sbr.rel (%p25) target = $region8
    $region5: #{residual_attention_block.1} parent=1 // loop_body
      %s29 = ssub.s32 %s24, 1
      %s30 = ssub.s32 %s24, 2
      %s31 = sadd.s32 %s24, 1
      %s32 = ssub.s32 %s24, %s31
      %p33 = scmp.eq.s32.totalorder %s32, 0
      %s35 = sadd.s32 %s34, 1
      %s36 = scalar_select %p33, %s34, %s35
      %p39 = pneg %p33
      %p40 = scmp.eq.s32.totalorder %s24, 1
      %p41 = por %p39, %p40
      %p42 = scmp.ne.s32.totalorder %s34, %s37
      %p43 = scmp.eq.s32.totalorder %s24, 0
      %p44 = por %p42, %p43
      %p45 = scmp.ne.s32.totalorder %s34, %s37
      %p46 = scmp.eq.s32.totalorder %s29, 1
      %p47 = por %p45, %p46
      %p48 = scmp.ne.s32.totalorder %s37, %s38
      %p49 = scmp.eq.s32.totalorder %s29, 0
      %p50 = por %p48, %p49
      %p51 = scmp.ne.s32.totalorder %s37, %s38
      %p52 = scmp.eq.s32.totalorder %s30, 1
      %p53 = por %p51, %p52
      %p55 = scmp.ne.s32.totalorder %s38, %s54
      %p56 = scmp.eq.s32.totalorder %s30, 0
      %p57 = por %p55, %p56
      %s59 = sadd.s32 %s58, 1
      %p62 = scmp.eq.s32.totalorder %s24, 1
      %p63 = scmp.ne.s32.totalorder %s58, %s60
      %p64 = scmp.eq.s32.totalorder %s24, 0
      %p65 = por %p63, %p64
      %p66 = scmp.ne.s32.totalorder %s58, %s60
      %p67 = scmp.eq.s32.totalorder %s29, 1
      %p68 = por %p66, %p67
      %p69 = scmp.ne.s32.totalorder %s60, %s61
      %p70 = scmp.eq.s32.totalorder %s29, 0
      %p71 = por %p69, %p70
      %p72 = scmp.ne.s32.totalorder %s60, %s61
      %p73 = scmp.eq.s32.totalorder %s30, 1
      %p74 = por %p72, %p73
      %p76 = scmp.ne.s32.totalorder %s61, %s75
      %p77 = scmp.eq.s32.totalorder %s30, 0
      %p78 = por %p76, %p77
      %s80 = sadd.s32 %s79, 1
      %p83 = scmp.eq.s32.totalorder %s24, 1
      %p84 = scmp.ne.s32.totalorder %s79, %s81
      %p85 = scmp.eq.s32.totalorder %s24, 0
      %p86 = por %p84, %p85
      %p87 = scmp.ne.s32.totalorder %s79, %s81
      %p88 = scmp.eq.s32.totalorder %s29, 1
      %p89 = por %p87, %p88
      %p90 = scmp.ne.s32.totalorder %s81, %s82
      %p91 = scmp.eq.s32.totalorder %s29, 0
      %p92 = por %p90, %p91
      %p93 = scmp.ne.s32.totalorder %s81, %s82
      %p94 = scmp.eq.s32.totalorder %s30, 1
      %p95 = por %p93, %p94
      %p97 = scmp.ne.s32.totalorder %s82, %s96
      %p98 = scmp.eq.s32.totalorder %s30, 0
      %p99 = por %p97, %p98
      %s101 = sadd.s32 %s100, 1
      %p104 = scmp.eq.s32.totalorder %s24, 1
      %p105 = scmp.ne.s32.totalorder %s100, %s102
      %p106 = scmp.eq.s32.totalorder %s24, 0
      %p107 = por %p105, %p106
      %p108 = scmp.ne.s32.totalorder %s100, %s102
      %p109 = scmp.eq.s32.totalorder %s29, 1
      %p110 = por %p108, %p109
      %p111 = scmp.ne.s32.totalorder %s102, %s103
      %p112 = scmp.eq.s32.totalorder %s29, 0
      %p113 = por %p111, %p112
      %p114 = scmp.ne.s32.totalorder %s102, %s103
      %p115 = scmp.eq.s32.totalorder %s30, 1
      %p116 = por %p114, %p115
      %p118 = scmp.ne.s32.totalorder %s103, %s117
      %p119 = scmp.eq.s32.totalorder %s30, 0
      %p120 = por %p118, %p119
      %s122 = sadd.s32 %s121, 1
      %p125 = scmp.eq.s32.totalorder %s24, 1
      %p126 = scmp.ne.s32.totalorder %s121, %s123
      %p127 = scmp.eq.s32.totalorder %s24, 0
      %p128 = por %p126, %p127
      %p129 = scmp.ne.s32.totalorder %s121, %s123
      %p130 = scmp.eq.s32.totalorder %s29, 1
      %p131 = por %p129, %p130
      %p132 = scmp.ne.s32.totalorder %s123, %s124
      %p133 = scmp.eq.s32.totalorder %s29, 0
      %p134 = por %p132, %p133
      %p135 = scmp.ne.s32.totalorder %s123, %s124
      %p136 = scmp.eq.s32.totalorder %s30, 1
      %p137 = por %p135, %p136
      %p139 = scmp.ne.s32.totalorder %s124, %s138
      %p140 = scmp.eq.s32.totalorder %s30, 0
      %p141 = por %p139, %p140
      %s143 = sadd.s32 %s142, 1
      %p146 = scmp.eq.s32.totalorder %s24, 1
      %p147 = scmp.ne.s32.totalorder %s142, %s144
      %p148 = scmp.eq.s32.totalorder %s24, 0
      %p149 = por %p147, %p148
      %p150 = scmp.ne.s32.totalorder %s142, %s144
      %p151 = scmp.eq.s32.totalorder %s29, 1
      %p152 = por %p150, %p151
      %p153 = scmp.ne.s32.totalorder %s144, %s145
      %p154 = scmp.eq.s32.totalorder %s29, 0
      %p155 = por %p153, %p154
      %p156 = scmp.ne.s32.totalorder %s144, %s145
      %p157 = scmp.eq.s32.totalorder %s30, 1
      %p158 = por %p156, %p157
      %p160 = scmp.ne.s32.totalorder %s145, %s159
      %p161 = scmp.eq.s32.totalorder %s30, 0
      %p162 = por %p160, %p161
      %s164 = sadd.s32 %s163, 1
      %p167 = scmp.eq.s32.totalorder %s24, 1
      %p168 = scmp.ne.s32.totalorder %s163, %s165
      %p169 = scmp.eq.s32.totalorder %s24, 0
      %p170 = por %p168, %p169
      %p171 = scmp.ne.s32.totalorder %s163, %s165
      %p172 = scmp.eq.s32.totalorder %s29, 1
      %p173 = por %p171, %p172
      %p174 = scmp.ne.s32.totalorder %s165, %s166
      %p175 = scmp.eq.s32.totalorder %s29, 0
      %p176 = por %p174, %p175
      %p177 = scmp.ne.s32.totalorder %s165, %s166
      %p178 = scmp.eq.s32.totalorder %s30, 1
      %p179 = por %p177, %p178
      %p181 = scmp.ne.s32.totalorder %s166, %s180
      %p182 = scmp.eq.s32.totalorder %s30, 0
      %p183 = por %p181, %p182
      %s185 = sadd.s32 %s184, 1
      %p188 = scmp.eq.s32.totalorder %s24, 1
      %p189 = scmp.ne.s32.totalorder %s184, %s186
      %p190 = scmp.eq.s32.totalorder %s24, 0
      %p191 = por %p189, %p190
      %p192 = scmp.ne.s32.totalorder %s184, %s186
      %p193 = scmp.eq.s32.totalorder %s29, 1
      %p194 = por %p192, %p193
      %p195 = scmp.ne.s32.totalorder %s186, %s187
      %p196 = scmp.eq.s32.totalorder %s29, 0
      %p197 = por %p195, %p196
      %p198 = scmp.ne.s32.totalorder %s186, %s187
      %p199 = scmp.eq.s32.totalorder %s30, 1
      %p200 = por %p198, %p199
      %p202 = scmp.ne.s32.totalorder %s187, %s201
      %p203 = scmp.eq.s32.totalorder %s30, 0
      %p204 = por %p202, %p203
      %s206 = sadd.s32 %s205, 1
      %p209 = scmp.eq.s32.totalorder %s24, 1
      %p210 = scmp.ne.s32.totalorder %s205, %s207
      %p211 = scmp.eq.s32.totalorder %s24, 0
      %p212 = por %p210, %p211
      %p213 = scmp.ne.s32.totalorder %s205, %s207
      %p214 = scmp.eq.s32.totalorder %s29, 1
      %p215 = por %p213, %p214
      %p216 = scmp.ne.s32.totalorder %s207, %s208
      %p217 = scmp.eq.s32.totalorder %s29, 0
      %p218 = por %p216, %p217
      %p219 = scmp.ne.s32.totalorder %s207, %s208
      %p220 = scmp.eq.s32.totalorder %s30, 1
      %p221 = por %p219, %p220
      %p223 = scmp.ne.s32.totalorder %s208, %s222
      %p224 = scmp.eq.s32.totalorder %s30, 0
      %p225 = por %p223, %p224
      %s227 = sadd.s32 %s226, 1
      %p230 = scmp.eq.s32.totalorder %s24, 1
      %p231 = scmp.ne.s32.totalorder %s226, %s228
      %p232 = scmp.eq.s32.totalorder %s24, 0
      %p233 = por %p231, %p232
      %p234 = scmp.ne.s32.totalorder %s226, %s228
      %p235 = scmp.eq.s32.totalorder %s29, 1
      %p236 = por %p234, %p235
      %p237 = scmp.ne.s32.totalorder %s228, %s229
      %p238 = scmp.eq.s32.totalorder %s29, 0
      %p239 = por %p237, %p238
      %p240 = scmp.ne.s32.totalorder %s228, %s229
      %p241 = scmp.eq.s32.totalorder %s30, 1
      %p242 = por %p240, %p241
      %p244 = scmp.ne.s32.totalorder %s229, %s243
      %p245 = scmp.eq.s32.totalorder %s30, 0
      %p246 = por %p244, %p245
      %s248 = sadd.s32 %s247, 1
      %p251 = scmp.eq.s32.totalorder %s24, 1
      %p252 = scmp.ne.s32.totalorder %s247, %s249
      %p253 = scmp.eq.s32.totalorder %s24, 0
      %p254 = por %p252, %p253
      %p255 = scmp.ne.s32.totalorder %s247, %s249
      %p256 = scmp.eq.s32.totalorder %s29, 1
      %p257 = por %p255, %p256
      %p258 = scmp.ne.s32.totalorder %s249, %s250
      %p259 = scmp.eq.s32.totalorder %s29, 0
      %p260 = por %p258, %p259
      %p261 = scmp.ne.s32.totalorder %s249, %s250
      %p262 = scmp.eq.s32.totalorder %s30, 1
      %p263 = por %p261, %p262
      %p265 = scmp.ne.s32.totalorder %s250, %s264
      %p266 = scmp.eq.s32.totalorder %s30, 0
      %p267 = por %p265, %p266
      %s269 = sadd.s32 %s268, 1
      %p272 = scmp.eq.s32.totalorder %s24, 1
      %p273 = scmp.ne.s32.totalorder %s268, %s270
      %p274 = scmp.eq.s32.totalorder %s24, 0
      %p275 = por %p273, %p274
      %p276 = scmp.ne.s32.totalorder %s268, %s270
      %p277 = scmp.eq.s32.totalorder %s29, 1
      %p278 = por %p276, %p277
      %p279 = scmp.ne.s32.totalorder %s270, %s271
      %p280 = scmp.eq.s32.totalorder %s29, 0
      %p281 = por %p279, %p280
      %p282 = scmp.ne.s32.totalorder %s270, %s271
      %p283 = scmp.eq.s32.totalorder %s30, 1
      %p284 = por %p282, %p283
      %p286 = scmp.ne.s32.totalorder %s271, %s285
      %p287 = scmp.eq.s32.totalorder %s30, 0
      %p288 = por %p286, %p287
      %s290 = sadd.s32 %s289, 1
      %p293 = scmp.eq.s32.totalorder %s24, 1
      %p294 = scmp.ne.s32.totalorder %s289, %s291
      %p295 = scmp.eq.s32.totalorder %s24, 0
      %p296 = por %p294, %p295
      %p297 = scmp.ne.s32.totalorder %s289, %s291
      %p298 = scmp.eq.s32.totalorder %s29, 1
      %p299 = por %p297, %p298
      %p300 = scmp.ne.s32.totalorder %s291, %s292
      %p301 = scmp.eq.s32.totalorder %s29, 0
      %p302 = por %p300, %p301
      %p303 = scmp.ne.s32.totalorder %s291, %s292
      %p304 = scmp.eq.s32.totalorder %s30, 1
      %p305 = por %p303, %p304
      %p307 = scmp.ne.s32.totalorder %s292, %s306
      %p308 = scmp.eq.s32.totalorder %s30, 0
      %p309 = por %p307, %p308
      %s310 = ssub.s32 %s24, %s31
      %p311 = scmp.eq.s32.totalorder %s310, 0
      %s313 = sadd.s32 %s312, 1
      %s314 = scalar_select %p311, %s312, %s313
      %p317 = pneg %p311
      %p318 = scmp.eq.s32.totalorder %s24, 1
      %p319 = por %p317, %p318
      %p320 = scmp.ne.s32.totalorder %s312, %s315
      %p321 = scmp.eq.s32.totalorder %s24, 0
      %p322 = por %p320, %p321
      %p323 = scmp.ne.s32.totalorder %s312, %s315
      %p324 = scmp.eq.s32.totalorder %s29, 1
      %p325 = por %p323, %p324
      %p326 = scmp.ne.s32.totalorder %s315, %s316
      %p327 = scmp.eq.s32.totalorder %s29, 0
      %p328 = por %p326, %p327
      %p329 = scmp.ne.s32.totalorder %s315, %s316
      %p330 = scmp.eq.s32.totalorder %s30, 1
      %p331 = por %p329, %p330
      %p333 = scmp.ne.s32.totalorder %s316, %s332
      %p334 = scmp.eq.s32.totalorder %s30, 0
      %p335 = por %p333, %p334
      %s336 = ssub.s32 %s24, %s31
      %p337 = scmp.eq.s32.totalorder %s336, 0
      %s339 = sadd.s32 %s338, 1
      %s340 = scalar_select %p337, %s338, %s339
      %p343 = pneg %p337
      %p344 = scmp.eq.s32.totalorder %s24, 1
      %p345 = por %p343, %p344
      %p346 = scmp.ne.s32.totalorder %s338, %s341
      %p347 = scmp.eq.s32.totalorder %s24, 0
      %p348 = por %p346, %p347
      %p349 = scmp.ne.s32.totalorder %s338, %s341
      %p350 = scmp.eq.s32.totalorder %s29, 1
      %p351 = por %p349, %p350
      %p352 = scmp.ne.s32.totalorder %s341, %s342
      %p353 = scmp.eq.s32.totalorder %s29, 0
      %p354 = por %p352, %p353
      %p355 = scmp.ne.s32.totalorder %s341, %s342
      %p356 = scmp.eq.s32.totalorder %s30, 1
      %p357 = por %p355, %p356
      %p359 = scmp.ne.s32.totalorder %s342, %s358
      %p360 = scmp.eq.s32.totalorder %s30, 0
      %p361 = por %p359, %p360
      %p362 = scmp.le.s32.totalorder 1, %s24
      %p363 = scmp.lt.s32.totalorder %s24, 3
      %p364 = pnand %p362, %p363
      %p365 = pneg %p364
      // Predicated region
      $region9: #{residual_attention_block.1} parent=5 // pred_check
        _
      $region10: #{residual_attention_block.1} parent=5 // pred_check_branch
        %367 = sbr.rel (%p364) target = $region12
      $region11: #{residual_attention_block.1} parent=5 // pred_region
        %s368 = ssub.s32 %s24, 1
        // Predicated region
        $region13: #{residual_attention_block.1} parent=11 // pred_check
          %p369 = pneg %p71
        $region14: #{residual_attention_block.1} parent=11 // pred_check_branch
          %371 = sbr.rel (%p369) target = $region16
        $region15: #{residual_attention_block.1} parent=11 // pred_region
          _
        $region16: #{residual_attention_block.1} parent=11 // pred_fallthru
          _
        // Predicated region
        $region17: #{residual_attention_block.1} parent=11 // pred_check
          %p372 = pneg %p92
        $region18: #{residual_attention_block.1} parent=11 // pred_check_branch
          %374 = sbr.rel (%p372) target = $region20
        $region19: #{residual_attention_block.1} parent=11 // pred_region
          _
        $region20: #{residual_attention_block.1} parent=11 // pred_fallthru
          _
        // Predicated region
        $region21: #{residual_attention_block.1} parent=11 // pred_check
          %p375 = pneg %p113
        $region22: #{residual_attention_block.1} parent=11 // pred_check_branch
          %377 = sbr.rel (%p375) target = $region24
        $region23: #{residual_attention_block.1} parent=11 // pred_region
          _
        $region24: #{residual_attention_block.1} parent=11 // pred_fallthru
          _
        // Predicated region
        $region25: #{residual_attention_block.1} parent=11 // pred_check
          %p378 = pneg %p134
        $region26: #{residual_attention_block.1} parent=11 // pred_check_branch
          %380 = sbr.rel (%p378) target = $region28
        $region27: #{residual_attention_block.1} parent=11 // pred_region
          _
        $region28: #{residual_attention_block.1} parent=11 // pred_fallthru
          _
        // Predicated region
        $region29: #{residual_attention_block.1} parent=11 // pred_check
          %p381 = pneg %p155
        $region30: #{residual_attention_block.1} parent=11 // pred_check_branch
          %383 = sbr.rel (%p381) target = $region32
        $region31: #{residual_attention_block.1} parent=11 // pred_region
          _
        $region32: #{residual_attention_block.1} parent=11 // pred_fallthru
          _
        // Predicated region
        $region33: #{residual_attention_block.1} parent=11 // pred_check
          %p384 = pneg %p176
        $region34: #{residual_attention_block.1} parent=11 // pred_check_branch
          %386 = sbr.rel (%p384) target = $region36
        $region35: #{residual_attention_block.1} parent=11 // pred_region
          _
        $region36: #{residual_attention_block.1} parent=11 // pred_fallthru
          _
        // Predicated region
        $region37: #{residual_attention_block.1} parent=11 // pred_check
          %p387 = pneg %p197
        $region38: #{residual_attention_block.1} parent=11 // pred_check_branch
          %389 = sbr.rel (%p387) target = $region40
        $region39: #{residual_attention_block.1} parent=11 // pred_region
          _
        $region40: #{residual_attention_block.1} parent=11 // pred_fallthru
          _
        // Predicated region
        $region41: #{residual_attention_block.1} parent=11 // pred_check
          %p390 = pneg %p218
        $region42: #{residual_attention_block.1} parent=11 // pred_check_branch
          %392 = sbr.rel (%p390) target = $region44
        $region43: #{residual_attention_block.1} parent=11 // pred_region
          _
        $region44: #{residual_attention_block.1} parent=11 // pred_fallthru
          _
        // Predicated region
        $region45: #{residual_attention_block.1} parent=11 // pred_check
          %p393 = pneg %p239
        $region46: #{residual_attention_block.1} parent=11 // pred_check_branch
          %395 = sbr.rel (%p393) target = $region48
        $region47: #{residual_attention_block.1} parent=11 // pred_region
          _
        $region48: #{residual_attention_block.1} parent=11 // pred_fallthru
          _
        // Predicated region
        $region49: #{residual_attention_block.1} parent=11 // pred_check
          %p396 = pneg %p260
        $region50: #{residual_attention_block.1} parent=11 // pred_check_branch
          %398 = sbr.rel (%p396) target = $region52
        $region51: #{residual_attention_block.1} parent=11 // pred_region
          _
        $region52: #{residual_attention_block.1} parent=11 // pred_fallthru
          _
        // Predicated region
        $region53: #{residual_attention_block.1} parent=11 // pred_check
          %p399 = pneg %p281
        $region54: #{residual_attention_block.1} parent=11 // pred_check_branch
          %401 = sbr.rel (%p399) target = $region56
        $region55: #{residual_attention_block.1} parent=11 // pred_region
          _
        $region56: #{residual_attention_block.1} parent=11 // pred_fallthru
          _
        // Predicated region
        $region57: #{residual_attention_block.1} parent=11 // pred_check
          %p402 = pneg %p302
        $region58: #{residual_attention_block.1} parent=11 // pred_check_branch
          %404 = sbr.rel (%p402) target = $region60
        $region59: #{residual_attention_block.1} parent=11 // pred_region
          _
        $region60: #{residual_attention_block.1} parent=11 // pred_fallthru
          _
      $region12: #{residual_attention_block.1} parent=5 // pred_fallthru
        _
      %p405 = scmp.lt.s32.totalorder %s24, 2
      // Predicated region
      $region61: #{residual_attention_block.1} parent=5 // pred_check
        %p406 = pneg %p405
      $region62: #{residual_attention_block.1} parent=5 // pred_check_branch
        %408 = sbr.rel (%p406) target = $region64
      $region63: #{residual_attention_block.1} parent=5 // pred_region
        // Predicated region
        $region65: #{residual_attention_block.1} parent=63 // pred_check
          %p409 = pneg %p44
        $region66: #{residual_attention_block.1} parent=63 // pred_check_branch
          %411 = sbr.rel (%p409) target = $region68
        $region67: #{residual_attention_block.1} parent=63 // pred_region
          %p412 = scmp.lt.s32.totalorder %s24, 1
          %s413 = scalar_select %p412, %s24, 1
          %s414 = smul.addr %s413, 8
          %s415 = scalar_lea.vmem %s0, %s414
        $region68: #{residual_attention_block.1} parent=63 // pred_fallthru
          _
      $region64: #{residual_attention_block.1} parent=5 // pred_fallthru
        _
      %p416 = scmp.le.s32.totalorder 1, %s24
      %p417 = scmp.lt.s32.totalorder %s24, 3
      %p418 = pnand %p416, %p417
      %p419 = pneg %p418
      // Predicated region
      $region69: #{residual_attention_block.1} parent=5 // pred_check
        _
      $region70: #{residual_attention_block.1} parent=5 // pred_check_branch
        %421 = sbr.rel (%p418) target = $region72
      $region71: #{residual_attention_block.1} parent=5 // pred_region
        %s422 = ssub.s32 %s24, 1
        %p423 = scmp.lt.s32.totalorder %s29, 1
        %s424 = scalar_select %p423, %s29, 1
        %s425 = smul.addr %s424, 8
        %s426 = scalar_lea.vmem %s0, %s425
        %p427 = pneg %p50
        %p428 = pneg %p47
        %p429 = pneg %p71
        %p430 = pneg %p68
        %p431 = pneg %p92
        %p432 = pneg %p89
        %p433 = pneg %p113
        %p434 = pneg %p110
        %p435 = pneg %p134
        %p436 = pneg %p131
        %p437 = pneg %p155
        %p438 = pneg %p152
        %p439 = pneg %p176
        %p440 = pneg %p173
        %p441 = pneg %p197
        %p442 = pneg %p194
        %p443 = pneg %p218
        %p444 = pneg %p215
        %p445 = pneg %p239
        %p446 = pneg %p236
        %p447 = pneg %p260
        %p448 = pneg %p257
        %p449 = pneg %p281
        %p450 = pneg %p278
        %p451 = pneg %p302
        %p452 = pneg %p299
        %p453 = pneg %p328
        %p454 = pneg %p325
        %p455 = scmp.lt.s32.totalorder %s29, 1
        %s456 = scalar_select %p455, %s29, 1
        %s457 = smul.addr %s456, 8
        %s458 = scalar_lea.vmem %s13, %s457
        %p459 = pneg %p354
        %p460 = pneg %p351
        %s461 = sand.u32 %s341, 1
        %s462 = scalar_lea.sflag [#allocation3], %s461
        %s463 = sand.u32 %s341, 1
        %s464 = smul.addr %s463, 8
        %s465 = scalar_lea.vmem [#allocation2], %s464
        %p466 = scmp.lt.s32.totalorder %s29, 1
        %s467 = scalar_select %p466, %s29, 1
        %s468 = smul.addr %s467, 8
        %s469 = scalar_lea.vmem %s0, %s468
        %p470 = scmp.lt.s32.totalorder %s29, 1
        %s471 = scalar_select %p470, %s29, 1
        %s472 = smul.addr %s471, 8
        %s473 = scalar_lea.vmem %s13, %s472
        %v474 = vld [vmem:[%s469] sm:$0xff]
        %v475 = vld [vmem:[%s1] sm:$0x1]
        %v476 = vld [vmem:[%s2] sm:$0x1]
        %vm477 = vcmask 261120
        %v478 = vsel %vm477, %v474, 0.0
        %479 = vadd.xlane.f32.xlu0 %v478
        %v480 = vpop.xlane.xlu0 %479
        %v481 = vrcp.pop 32.0
        %v482 = vmul.f32 %v480, %v481
        %v483 = vsub.f32 %v474, %v482
        %v484 = vmul.f32 %v483, %v483
        %v485 = vsel %vm477, %v484, 0.0
        %486 = vadd.xlane.f32.xlu0 %v485
        %v487 = vpop.xlane.xlu0 %486
        %v488 = vmul.f32 %v487, %v481
        %v489 = vadd.f32 %v488, 1e-05
        %v490 = vrsqrt.pop %v489
        %v491 = vmul.f32 %v483, %v490
        %v493 = vlaneseq
        %v494 = vshrl.u32 %v493, 7
        %v495 = vsub.s32 0, %v494
        %v496 = vrot.slane %v475, %v495
        %v498 = vmul.f32 %v491, %v496
        %v500 = vlaneseq
        %v501 = vshrl.u32 %v500, 7
        %v502 = vsub.s32 0, %v501
        %v503 = vrot.slane %v476, %v502
        %v505 = vadd.f32 %v498, %v503
        %v506 = vld [vmem:[%s3] sm:$0xff]
        %v507 = vld [vmem:[%s3 + $0x8] sm:$0xff]
        %v508 = vld [vmem:[%s3 + $0x10] sm:$0xff]
        %v509 = vld [vmem:[%s3 + $0x18] sm:$0xff]
        %v510 = vld [vmem:[%s3 + $0x20] sm:$0xff]
        %v511 = vld [vmem:[%s3 + $0x28] sm:$0xff]
        %v512 = vld [vmem:[%s3 + $0x30] sm:$0xff]
        %v513 = vld [vmem:[%s3 + $0x38] sm:$0xff]
        %v514 = vld [vmem:[%s3 + $0x40] sm:$0xff]
        %v515 = vld [vmem:[%s3 + $0x48] sm:$0xff]
        %v516 = vld [vmem:[%s3 + $0x50] sm:$0xff]
        %v517 = vld [vmem:[%s3 + $0x58] sm:$0xff]
        %v518 = vld [vmem:[%s4] sm:$0x1]
        %v520 = vlaneseq
        %v521 = vshrl.u32 %v520, 7
        %v522 = vsub.s32 0, %v521
        %v523 = vrot.slane %v518, %v522
        %v526 = vsel %vm477, %v505, 0
        %v529 = vsel %vm477, %v506, 0
        %v532 = vsel %vm477, %v507, 0
        %v535 = vsel %vm477, %v508, 0
        %v538 = vsel %vm477, %v509, 0
        %v541 = vsel %vm477, %v510, 0
        %v544 = vsel %vm477, %v511, 0
        %v547 = vsel %vm477, %v512, 0
        %v550 = vsel %vm477, %v513, 0
        %v553 = vsel %vm477, %v514, 0
        %v556 = vsel %vm477, %v515, 0
        %v559 = vsel %vm477, %v516, 0
        %v562 = vsel %vm477, %v517, 0
        %564 = vmatprep.subr.mxu0 0.0
        %565 = vmatpush1.xpose.msra.mxu0 %v529
        %566 = vmatprep.subr.mxu0 0.0
        %567 = vmatpush1.xpose.msra.mxu0 %v532
        %568 = vmatprep.subr.mxu0 0.0
        %569 = vmatpush1.xpose.msra.mxu0 %v535
        %570 = vmatprep.subr.mxu0 0.0
        %571 = vmatpush1.xpose.msra.mxu0 %v538
        %572 = vmatprep.subr.mxu0 0.0
        %573 = vmatpush1.xpose.msra.mxu0 %v541
        %574 = vmatprep.subr.mxu0 0.0
        %575 = vmatpush1.xpose.msra.mxu0 %v544
        %576 = vmatprep.subr.mxu0 0.0
        %577 = vmatpush1.xpose.msra.mxu0 %v547
        %578 = vmatprep.subr.mxu0 0.0
        %579 = vmatpush1.xpose.msra.mxu0 %v550
        %580 = vmatprep.subr.mxu0 0.0
        %581 = vmatpush1.xpose.msra.mxu0 %v553
        %582 = vmatprep.subr.mxu0 0.0
        %583 = vmatpush1.xpose.msra.mxu0 %v556
        %584 = vmatprep.subr.mxu0 0.0
        %585 = vmatpush1.xpose.msra.mxu0 %v559
        %586 = vmatprep.subr.mxu0 0.0
        %587 = vmatpush1.xpose.msra.mxu0 %v562
        %588 = vmatprep.subr.mxu0 0.0
        %589 = vmatpush1.xpose.msra.mxu0 0.0
        %590 = vmatprep.subr.mxu0 0.0
        %591 = vmatpush1.xpose.msra.mxu0 0.0
        %592 = vmatprep.subr.mxu0 0.0
        %593 = vmatpush1.xpose.msra.mxu0 0.0
        %594 = vmatprep.subr.mxu0 0.0
        %595 = vmatpush1.xpose.msra.mxu0 0.0
        %596 = vmatprep.subr.mxu0 0.0
        %597 = vmatpush1.xpose.msra.mxu0 0.0
        %598 = vmatprep.subr.mxu0 0.0
        %599 = vmatpush1.xpose.msra.mxu0 0.0
        %600 = vmatprep.subr.mxu0 0.0
        %601 = vmatpush1.xpose.msra.mxu0 0.0
        %602 = vmatprep.subr.mxu0 0.0
        %603 = vmatpush1.xpose.msra.mxu0 0.0
        %604 = vmatprep.subr.mxu0 0.0
        %605 = vmatpush1.xpose.msra.mxu0 0.0
        %606 = vmatprep.subr.mxu0 0.0
        %607 = vmatpush1.xpose.msra.mxu0 0.0
        %608 = vmatprep.subr.mxu0 0.0
        %609 = vmatpush1.xpose.msra.mxu0 0.0
        %610 = vmatprep.subr.mxu0 0.0
        %611 = vmatpush1.xpose.msra.mxu0 0.0
        %612 = vmatprep.subr.mxu0 0.0
        %613 = vmatpush1.xpose.msra.mxu0 0.0
        %614 = vmatprep.subr.mxu0 0.0
        %615 = vmatpush1.xpose.msra.mxu0 0.0
        %616 = vmatprep.subr.mxu0 0.0
        %617 = vmatpush1.xpose.msra.mxu0 0.0
        %618 = vmatprep.subr.mxu0 0.0
        %619 = vmatpush1.xpose.msra.mxu0 0.0
        %620 = vmatprep.subr.mxu0 0.0
        %621 = vmatpush1.xpose.msra.mxu0 0.0
        %622 = vmatprep.subr.mxu0 0.0
        %623 = vmatpush1.xpose.msra.mxu0 0.0
        %624 = vmatprep.subr.mxu0 0.0
        %625 = vmatpush1.xpose.msra.mxu0 0.0
        %626 = vmatprep.subr.mxu0 0.0
        %627 = vmatpush1.xpose.msra.mxu0 0.0
        %628 = vmatprep.mubr.f32.mxu0 0.0
        %629 = vmatmul.mubr.f32.gmra.mrb[0].mxu0 %v526
        %v630 = vpop.f32.mrb[0].mxu0
        %v631 = vadd.f32 %v523, %v630
        %v632 = vpop.f32.mrb[0].mxu0
        %633 = vdwg.mxu0
        %635 = vrot.lane.b32.xlu0 %v631, 120
        %v636 = vpop.permute.xlu0 %635
        %637 = vrot.lane.b32.xlu0 %v631, 112
        %v638 = vpop.permute.xlu0 %637
        %639 = vrot.lane.b32.xlu0 %v631, 104
        %v640 = vpop.permute.xlu0 %639
        %641 = vrot.lane.b32.xlu0 %v631, 96
        %v642 = vpop.permute.xlu0 %641
        %vm643 = vcmask 64512
        %v644 = vsel %vm643, %v631, 0
        %v646 = vsel %vm643, %v642, 0
        %648 = vmatprep.subr.mxu0 0.0
        %649 = vmatpush1.xpose.msra.mxu0 %v646
        %650 = vmatprep.subr.mxu0 0.0
        %651 = vmatpush1.xpose.msra.mxu0 0.0
        %652 = vmatprep.subr.mxu0 0.0
        %653 = vmatpush1.xpose.msra.mxu0 0.0
        %654 = vmatprep.subr.mxu0 0.0
        %655 = vmatpush1.xpose.msra.mxu0 0.0
        %656 = vmatprep.subr.mxu0 0.0
        %657 = vmatpush1.xpose.msra.mxu0 0.0
        %658 = vmatprep.subr.mxu0 0.0
        %659 = vmatpush1.xpose.msra.mxu0 0.0
        %660 = vmatprep.subr.mxu0 0.0
        %661 = vmatpush1.xpose.msra.mxu0 0.0
        %662 = vmatprep.subr.mxu0 0.0
        %663 = vmatpush1.xpose.msra.mxu0 0.0
        %664 = vmatprep.subr.mxu0 0.0
        %665 = vmatpush1.xpose.msra.mxu0 0.0
        %666 = vmatprep.subr.mxu0 0.0
        %667 = vmatpush1.xpose.msra.mxu0 0.0
        %668 = vmatprep.subr.mxu0 0.0
        %669 = vmatpush1.xpose.msra.mxu0 0.0
        %670 = vmatprep.subr.mxu0 0.0
        %671 = vmatpush1.xpose.msra.mxu0 0.0
        %672 = vmatprep.subr.mxu0 0.0
        %673 = vmatpush1.xpose.msra.mxu0 0.0
        %674 = vmatprep.subr.mxu0 0.0
        %675 = vmatpush1.xpose.msra.mxu0 0.0
        %676 = vmatprep.subr.mxu0 0.0
        %677 = vmatpush1.xpose.msra.mxu0 0.0
        %678 = vmatprep.subr.mxu0 0.0
        %679 = vmatpush1.xpose.msra.mxu0 0.0
        %680 = vmatprep.subr.mxu0 0.0
        %681 = vmatpush1.xpose.msra.mxu0 0.0
        %682 = vmatprep.subr.mxu0 0.0
        %683 = vmatpush1.xpose.msra.mxu0 0.0
        %684 = vmatprep.subr.mxu0 0.0
        %685 = vmatpush1.xpose.msra.mxu0 0.0
        %686 = vmatprep.subr.mxu0 0.0
        %687 = vmatpush1.xpose.msra.mxu0 0.0
        %688 = vmatprep.subr.mxu0 0.0
        %689 = vmatpush1.xpose.msra.mxu0 0.0
        %690 = vmatprep.subr.mxu0 0.0
        %691 = vmatpush1.xpose.msra.mxu0 0.0
        %692 = vmatprep.subr.mxu0 0.0
        %693 = vmatpush1.xpose.msra.mxu0 0.0
        %694 = vmatprep.subr.mxu0 0.0
        %695 = vmatpush1.xpose.msra.mxu0 0.0
        %696 = vmatprep.subr.mxu0 0.0
        %697 = vmatpush1.xpose.msra.mxu0 0.0
        %698 = vmatprep.subr.mxu0 0.0
        %699 = vmatpush1.xpose.msra.mxu0 0.0
        %700 = vmatprep.subr.mxu0 0.0
        %701 = vmatpush1.xpose.msra.mxu0 0.0
        %702 = vmatprep.subr.mxu0 0.0
        %703 = vmatpush1.xpose.msra.mxu0 0.0
        %704 = vmatprep.subr.mxu0 0.0
        %705 = vmatpush1.xpose.msra.mxu0 0.0
        %706 = vmatprep.subr.mxu0 0.0
        %707 = vmatpush1.xpose.msra.mxu0 0.0
        %708 = vmatprep.subr.mxu0 0.0
        %709 = vmatpush1.xpose.msra.mxu0 0.0
        %710 = vmatprep.subr.mxu0 0.0
        %711 = vmatpush1.xpose.msra.mxu0 0.0
        %712 = vmatprep.mubr.f32.mxu0 0.0
        %713 = vmatmul.mubr.f32.gmra.mrb[0].mxu0 %v644
        %v714 = vpop.f32.mrb[0].mxu0
        %v715 = vadd.f32 0.0, %v714
        %v716 = vpop.f32.mrb[0].mxu0
        %717 = vdwg.mxu0
        %718 = vrot.lane.b32.xlu0 %v636, 96
        %v719 = vpop.permute.xlu0 %718
        %v720 = vsel %vm643, %v636, 0
        %v722 = vsel %vm643, %v719, 0
        %724 = vmatprep.subr.mxu0 0.0
        %725 = vmatpush1.xpose.msra.mxu0 %v722
        %726 = vmatprep.subr.mxu0 0.0
        %727 = vmatpush1.xpose.msra.mxu0 0.0
        %728 = vmatprep.subr.mxu0 0.0
        %729 = vmatpush1.xpose.msra.mxu0 0.0
        %730 = vmatprep.subr.mxu0 0.0
        %731 = vmatpush1.xpose.msra.mxu0 0.0
        %732 = vmatprep.subr.mxu0 0.0
        %733 = vmatpush1.xpose.msra.mxu0 0.0
        %734 = vmatprep.subr.mxu0 0.0
        %735 = vmatpush1.xpose.msra.mxu0 0.0
        %736 = vmatprep.subr.mxu0 0.0
        %737 = vmatpush1.xpose.msra.mxu0 0.0
        %738 = vmatprep.subr.mxu0 0.0
        %739 = vmatpush1.xpose.msra.mxu0 0.0
        %740 = vmatprep.subr.mxu0 0.0
        %741 = vmatpush1.xpose.msra.mxu0 0.0
        %742 = vmatprep.subr.mxu0 0.0
        %743 = vmatpush1.xpose.msra.mxu0 0.0
        %744 = vmatprep.subr.mxu0 0.0
        %745 = vmatpush1.xpose.msra.mxu0 0.0
        %746 = vmatprep.subr.mxu0 0.0
        %747 = vmatpush1.xpose.msra.mxu0 0.0
        %748 = vmatprep.subr.mxu0 0.0
        %749 = vmatpush1.xpose.msra.mxu0 0.0
        %750 = vmatprep.subr.mxu0 0.0
        %751 = vmatpush1.xpose.msra.mxu0 0.0
        %752 = vmatprep.subr.mxu0 0.0
        %753 = vmatpush1.xpose.msra.mxu0 0.0
        %754 = vmatprep.subr.mxu0 0.0
        %755 = vmatpush1.xpose.msra.mxu0 0.0
        %756 = vmatprep.subr.mxu0 0.0
        %757 = vmatpush1.xpose.msra.mxu0 0.0
        %758 = vmatprep.subr.mxu0 0.0
        %759 = vmatpush1.xpose.msra.mxu0 0.0
        %760 = vmatprep.subr.mxu0 0.0
        %761 = vmatpush1.xpose.msra.mxu0 0.0
        %762 = vmatprep.subr.mxu0 0.0
        %763 = vmatpush1.xpose.msra.mxu0 0.0
        %764 = vmatprep.subr.mxu0 0.0
        %765 = vmatpush1.xpose.msra.mxu0 0.0
        %766 = vmatprep.subr.mxu0 0.0
        %767 = vmatpush1.xpose.msra.mxu0 0.0
        %768 = vmatprep.subr.mxu0 0.0
        %769 = vmatpush1.xpose.msra.mxu0 0.0
        %770 = vmatprep.subr.mxu0 0.0
        %771 = vmatpush1.xpose.msra.mxu0 0.0
        %772 = vmatprep.subr.mxu0 0.0
        %773 = vmatpush1.xpose.msra.mxu0 0.0
        %774 = vmatprep.subr.mxu0 0.0
        %775 = vmatpush1.xpose.msra.mxu0 0.0
        %776 = vmatprep.subr.mxu0 0.0
        %777 = vmatpush1.xpose.msra.mxu0 0.0
        %778 = vmatprep.subr.mxu0 0.0
        %779 = vmatpush1.xpose.msra.mxu0 0.0
        %780 = vmatprep.subr.mxu0 0.0
        %781 = vmatpush1.xpose.msra.mxu0 0.0
        %782 = vmatprep.subr.mxu0 0.0
        %783 = vmatpush1.xpose.msra.mxu0 0.0
        %784 = vmatprep.subr.mxu0 0.0
        %785 = vmatpush1.xpose.msra.mxu0 0.0
        %786 = vmatprep.subr.mxu0 0.0
        %787 = vmatpush1.xpose.msra.mxu0 0.0
        %788 = vmatprep.mubr.f32.mxu0 0.0
        %789 = vmatmul.mubr.f32.gmra.mrb[0].mxu0 %v720
        %v790 = vpop.f32.mrb[0].mxu0
        %v791 = vadd.f32 0.0, %v790
        %v792 = vpop.f32.mrb[0].mxu0
        %793 = vdwg.mxu0
        %794 = vrot.lane.b32.xlu0 %v638, 96
        %v795 = vpop.permute.xlu0 %794
        %v796 = vsel %vm643, %v638, 0
        %v798 = vsel %vm643, %v795, 0
        %800 = vmatprep.subr.mxu0 0.0
        %801 = vmatpush1.xpose.msra.mxu0 %v798
        %802 = vmatprep.subr.mxu0 0.0
        %803 = vmatpush1.xpose.msra.mxu0 0.0
        %804 = vmatprep.subr.mxu0 0.0
        %805 = vmatpush1.xpose.msra.mxu0 0.0
        %806 = vmatprep.subr.mxu0 0.0
        %807 = vmatpush1.xpose.msra.mxu0 0.0
        %808 = vmatprep.subr.mxu0 0.0
        %809 = vmatpush1.xpose.msra.mxu0 0.0
        %810 = vmatprep.subr.mxu0 0.0
        %811 = vmatpush1.xpose.msra.mxu0 0.0
        %812 = vmatprep.subr.mxu0 0.0
        %813 = vmatpush1.xpose.msra.mxu0 0.0
        %814 = vmatprep.subr.mxu0 0.0
        %815 = vmatpush1.xpose.msra.mxu0 0.0
        %816 = vmatprep.subr.mxu0 0.0
        %817 = vmatpush1.xpose.msra.mxu0 0.0
        %818 = vmatprep.subr.mxu0 0.0
        %819 = vmatpush1.xpose.msra.mxu0 0.0
        %820 = vmatprep.subr.mxu0 0.0
        %821 = vmatpush1.xpose.msra.mxu0 0.0
        %822 = vmatprep.subr.mxu0 0.0
        %823 = vmatpush1.xpose.msra.mxu0 0.0
        %824 = vmatprep.subr.mxu0 0.0
        %825 = vmatpush1.xpose.msra.mxu0 0.0
        %826 = vmatprep.subr.mxu0 0.0
        %827 = vmatpush1.xpose.msra.mxu0 0.0
        %828 = vmatprep.subr.mxu0 0.0
        %829 = vmatpush1.xpose.msra.mxu0 0.0
        %830 = vmatprep.subr.mxu0 0.0
        %831 = vmatpush1.xpose.msra.mxu0 0.0
        %832 = vmatprep.subr.mxu0 0.0
        %833 = vmatpush1.xpose.msra.mxu0 0.0
        %834 = vmatprep.subr.mxu0 0.0
        %835 = vmatpush1.xpose.msra.mxu0 0.0
        %836 = vmatprep.subr.mxu0 0.0
        %837 = vmatpush1.xpose.msra.mxu0 0.0
        %838 = vmatprep.subr.mxu0 0.0
        %839 = vmatpush1.xpose.msra.mxu0 0.0
        %840 = vmatprep.subr.mxu0 0.0
        %841 = vmatpush1.xpose.msra.mxu0 0.0
        %842 = vmatprep.subr.mxu0 0.0
        %843 = vmatpush1.xpose.msra.mxu0 0.0
        %844 = vmatprep.subr.mxu0 0.0
        %845 = vmatpush1.xpose.msra.mxu0 0.0
        %846 = vmatprep.subr.mxu0 0.0
        %847 = vmatpush1.xpose.msra.mxu0 0.0
        %848 = vmatprep.subr.mxu0 0.0
        %849 = vmatpush1.xpose.msra.mxu0 0.0
        %850 = vmatprep.subr.mxu0 0.0
        %851 = vmatpush1.xpose.msra.mxu0 0.0
        %852 = vmatprep.subr.mxu0 0.0
        %853 = vmatpush1.xpose.msra.mxu0 0.0
        %854 = vmatprep.subr.mxu0 0.0
        %855 = vmatpush1.xpose.msra.mxu0 0.0
        %856 = vmatprep.subr.mxu0 0.0
        %857 = vmatpush1.xpose.msra.mxu0 0.0
        %858 = vmatprep.subr.mxu0 0.0
        %859 = vmatpush1.xpose.msra.mxu0 0.0
        %860 = vmatprep.subr.mxu0 0.0
        %861 = vmatpush1.xpose.msra.mxu0 0.0
        %862 = vmatprep.subr.mxu0 0.0
        %863 = vmatpush1.xpose.msra.mxu0 0.0
        %864 = vmatprep.mubr.f32.mxu0 0.0
        %865 = vmatmul.mubr.f32.gmra.mrb[0].mxu0 %v796
        %v866 = vpop.f32.mrb[0].mxu0
        %v867 = vadd.f32 0.0, %v866
        %v868 = vpop.f32.mrb[0].mxu0
        %869 = vdwg.mxu0
        %870 = vrot.lane.b32.xlu0 %v640, 96
        %v871 = vpop.permute.xlu0 %870
        %v872 = vsel %vm643, %v640, 0
        %v874 = vsel %vm643, %v871, 0
        %876 = vmatprep.subr.mxu0 0.0
        %877 = vmatpush1.xpose.msra.mxu0 %v874
        %878 = vmatprep.subr.mxu0 0.0
        %879 = vmatpush1.xpose.msra.mxu0 0.0
        %880 = vmatprep.subr.mxu0 0.0
        %881 = vmatpush1.xpose.msra.mxu0 0.0
        %882 = vmatprep.subr.mxu0 0.0
        %883 = vmatpush1.xpose.msra.mxu0 0.0
        %884 = vmatprep.subr.mxu0 0.0
        %885 = vmatpush1.xpose.msra.mxu0 0.0
        %886 = vmatprep.subr.mxu0 0.0
        %887 = vmatpush1.xpose.msra.mxu0 0.0
        %888 = vmatprep.subr.mxu0 0.0
        %889 = vmatpush1.xpose.msra.mxu0 0.0
        %890 = vmatprep.subr.mxu0 0.0
        %891 = vmatpush1.xpose.msra.mxu0 0.0
        %892 = vmatprep.subr.mxu0 0.0
        %893 = vmatpush1.xpose.msra.mxu0 0.0
        %894 = vmatprep.subr.mxu0 0.0
        %895 = vmatpush1.xpose.msra.mxu0 0.0
        %896 = vmatprep.subr.mxu0 0.0
        %897 = vmatpush1.xpose.msra.mxu0 0.0
        %898 = vmatprep.subr.mxu0 0.0
        %899 = vmatpush1.xpose.msra.mxu0 0.0
        %900 = vmatprep.subr.mxu0 0.0
        %901 = vmatpush1.xpose.msra.mxu0 0.0
        %902 = vmatprep.subr.mxu0 0.0
        %903 = vmatpush1.xpose.msra.mxu0 0.0
        %904 = vmatprep.subr.mxu0 0.0
        %905 = vmatpush1.xpose.msra.mxu0 0.0
        %906 = vmatprep.subr.mxu0 0.0
        %907 = vmatpush1.xpose.msra.mxu0 0.0
        %908 = vmatprep.subr.mxu0 0.0
        %909 = vmatpush1.xpose.msra.mxu0 0.0
        %910 = vmatprep.subr.mxu0 0.0
        %911 = vmatpush1.xpose.msra.mxu0 0.0
        %912 = vmatprep.subr.mxu0 0.0
        %913 = vmatpush1.xpose.msra.mxu0 0.0
        %914 = vmatprep.subr.mxu0 0.0
        %915 = vmatpush1.xpose.msra.mxu0 0.0
        %916 = vmatprep.subr.mxu0 0.0
        %917 = vmatpush1.xpose.msra.mxu0 0.0
        %918 = vmatprep.subr.mxu0 0.0
        %919 = vmatpush1.xpose.msra.mxu0 0.0
        %920 = vmatprep.subr.mxu0 0.0
        %921 = vmatpush1.xpose.msra.mxu0 0.0
        %922 = vmatprep.subr.mxu0 0.0
        %923 = vmatpush1.xpose.msra.mxu0 0.0
        %924 = vmatprep.subr.mxu0 0.0
        %925 = vmatpush1.xpose.msra.mxu0 0.0
        %926 = vmatprep.subr.mxu0 0.0
        %927 = vmatpush1.xpose.msra.mxu0 0.0
        %928 = vmatprep.subr.mxu0 0.0
        %929 = vmatpush1.xpose.msra.mxu0 0.0
        %930 = vmatprep.subr.mxu0 0.0
        %931 = vmatpush1.xpose.msra.mxu0 0.0
        %932 = vmatprep.subr.mxu0 0.0
        %933 = vmatpush1.xpose.msra.mxu0 0.0
        %934 = vmatprep.subr.mxu0 0.0
        %935 = vmatpush1.xpose.msra.mxu0 0.0
        %936 = vmatprep.subr.mxu0 0.0
        %937 = vmatpush1.xpose.msra.mxu0 0.0
        %938 = vmatprep.subr.mxu0 0.0
        %939 = vmatpush1.xpose.msra.mxu0 0.0
        %940 = vmatprep.mubr.f32.mxu0 0.0
        %941 = vmatmul.mubr.f32.gmra.mrb[0].mxu0 %v872
        %v942 = vpop.f32.mrb[0].mxu0
        %v943 = vadd.f32 0.0, %v942
        %v944 = vpop.f32.mrb[0].mxu0
        %945 = vdwg.mxu0
        %v946 = vmul.f32 %v715, 0.35355338
        %v947 = vmul.f32 %v791, 0.35355338
        %v948 = vmul.f32 %v867, 0.35355338
        %v949 = vmul.f32 %v943, 0.35355338
        %v950 = vsel %vm643, %v946, -inf
        %951 = vmax.xlane.f32.xlu0 %v950
        %v952 = vpop.xlane.xlu0 %951
        %v953 = vsel %vm643, %v947, -inf
        %954 = vmax.xlane.f32.xlu0 %v953
        %v955 = vpop.xlane.xlu0 %954
        %v956 = vsel %vm643, %v948, -inf
        %957 = vmax.xlane.f32.xlu0 %v956
        %v958 = vpop.xlane.xlu0 %957
        %v959 = vsel %vm643, %v949, -inf
        %960 = vmax.xlane.f32.xlu0 %v959
        %v961 = vpop.xlane.xlu0 %960
        %v962 = vsub.f32 %v946, %v952
        %v963 = vsub.f32 %v947, %v955
        %v964 = vsub.f32 %v948, %v958
        %v965 = vsub.f32 %v949, %v961
        %v966 = vmul.f32 %v962, 1.442695
        %v967 = vpow.pop %v966
        %v968 = vmul.f32 %v963, 1.442695
        %v969 = vpow.pop %v968
        %v970 = vmul.f32 %v964, 1.442695
        %v971 = vpow.pop %v970
        %v972 = vmul.f32 %v965, 1.442695
        %v973 = vpow.pop %v972
        %v974 = vsel %vm643, %v967, 0.0
        %975 = vadd.xlane.f32.xlu0 %v974
        %v976 = vpop.xlane.xlu0 %975
        %v977 = vsel %vm643, %v969, 0.0
        %978 = vadd.xlane.f32.xlu0 %v977
        %v979 = vpop.xlane.xlu0 %978
        %v980 = vsel %vm643, %v971, 0.0
        %981 = vadd.xlane.f32.xlu0 %v980
        %v982 = vpop.xlane.xlu0 %981
        %v983 = vsel %vm643, %v973, 0.0
        %984 = vadd.xlane.f32.xlu0 %v983
        %v985 = vpop.xlane.xlu0 %984
        %v986 = vrcp.pop %v976
        %v987 = vmul.f32 %v967, %v986
        %v988 = vrcp.pop %v979
        %v989 = vmul.f32 %v969, %v988
        %v990 = vrcp.pop %v982
        %v991 = vmul.f32 %v971, %v990
        %v992 = vrcp.pop %v985
        %v993 = vmul.f32 %v973, %v992
        %994 = vrot.lane.b32.xlu0 %v631, 64
        %v995 = vpop.permute.xlu0 %994
        %v998 = vsel %vm643, %v987, 0
        %1000 = vmatprep.subr.mxu0 0.0
        %1001 = vmatpush1.msra.mxu0 %v995
        %1002 = vmatprep.subr.mxu0 0.0
        %1003 = vmatpush1.msra.mxu0 0.0
        %1004 = vmatprep.subr.mxu0 0.0
        %1005 = vmatpush1.msra.mxu0 0.0
        %1006 = vmatprep.subr.mxu0 0.0
        %1007 = vmatpush1.msra.mxu0 0.0
        %1008 = vmatprep.subr.mxu0 0.0
        %1009 = vmatpush1.msra.mxu0 0.0
        %1010 = vmatprep.subr.mxu0 0.0
        %1011 = vmatpush1.msra.mxu0 0.0
        %1012 = vmatprep.subr.mxu0 0.0
        %1013 = vmatpush1.msra.mxu0 0.0
        %1014 = vmatprep.subr.mxu0 0.0
        %1015 = vmatpush1.msra.mxu0 0.0
        %1016 = vmatprep.subr.mxu0 0.0
        %1017 = vmatpush1.msra.mxu0 0.0
        %1018 = vmatprep.subr.mxu0 0.0
        %1019 = vmatpush1.msra.mxu0 0.0
        %1020 = vmatprep.subr.mxu0 0.0
        %1021 = vmatpush1.msra.mxu0 0.0
        %1022 = vmatprep.subr.mxu0 0.0
        %1023 = vmatpush1.msra.mxu0 0.0
        %1024 = vmatprep.subr.mxu0 0.0
        %1025 = vmatpush1.msra.mxu0 0.0
        %1026 = vmatprep.subr.mxu0 0.0
        %1027 = vmatpush1.msra.mxu0 0.0
        %1028 = vmatprep.subr.mxu0 0.0
        %1029 = vmatpush1.msra.mxu0 0.0
        %1030 = vmatprep.subr.mxu0 0.0
        %1031 = vmatpush1.msra.mxu0 0.0
        %1032 = vmatprep.subr.mxu0 0.0
        %1033 = vmatpush1.msra.mxu0 0.0
        %1034 = vmatprep.subr.mxu0 0.0
        %1035 = vmatpush1.msra.mxu0 0.0
        %1036 = vmatprep.subr.mxu0 0.0
        %1037 = vmatpush1.msra.mxu0 0.0
        %1038 = vmatprep.subr.mxu0 0.0
        %1039 = vmatpush1.msra.mxu0 0.0
        %1040 = vmatprep.subr.mxu0 0.0
        %1041 = vmatpush1.msra.mxu0 0.0
        %1042 = vmatprep.subr.mxu0 0.0
        %1043 = vmatpush1.msra.mxu0 0.0
        %1044 = vmatprep.subr.mxu0 0.0
        %1045 = vmatpush1.msra.mxu0 0.0
        %1046 = vmatprep.subr.mxu0 0.0
        %1047 = vmatpush1.msra.mxu0 0.0
        %1048 = vmatprep.subr.mxu0 0.0
        %1049 = vmatpush1.msra.mxu0 0.0
        %1050 = vmatprep.subr.mxu0 0.0
        %1051 = vmatpush1.msra.mxu0 0.0
        %1052 = vmatprep.subr.mxu0 0.0
        %1053 = vmatpush1.msra.mxu0 0.0
        %1054 = vmatprep.subr.mxu0 0.0
        %1055 = vmatpush1.msra.mxu0 0.0
        %1056 = vmatprep.subr.mxu0 0.0
        %1057 = vmatpush1.msra.mxu0 0.0
        %1058 = vmatprep.subr.mxu0 0.0
        %1059 = vmatpush1.msra.mxu0 0.0
        %1060 = vmatprep.subr.mxu0 0.0
        %1061 = vmatpush1.msra.mxu0 0.0
        %1062 = vmatprep.subr.mxu0 0.0
        %1063 = vmatpush1.msra.mxu0 0.0
        %1064 = vmatprep.mubr.f32.mxu0 0.0
        %1065 = vmatmul.mubr.f32.gmra.mrb[0].mxu0 %v998
        %v1066 = vpop.f32.mrb[0].mxu0
        %v1067 = vadd.f32 0.0, %v1066
        %v1068 = vpop.f32.mrb[0].mxu0
        %1069 = vdwg.mxu0
        %1070 = vrot.lane.b32.xlu0 %v636, 64
        %v1071 = vpop.permute.xlu0 %1070
        %v1074 = vsel %vm643, %v989, 0
        %1076 = vmatprep.subr.mxu0 0.0
        %1077 = vmatpush1.msra.mxu0 %v1071
        %1078 = vmatprep.subr.mxu0 0.0
        %1079 = vmatpush1.msra.mxu0 0.0
        %1080 = vmatprep.subr.mxu0 0.0
        %1081 = vmatpush1.msra.mxu0 0.0
        %1082 = vmatprep.subr.mxu0 0.0
        %1083 = vmatpush1.msra.mxu0 0.0
        %1084 = vmatprep.subr.mxu0 0.0
        %1085 = vmatpush1.msra.mxu0 0.0
        %1086 = vmatprep.subr.mxu0 0.0
        %1087 = vmatpush1.msra.mxu0 0.0
        %1088 = vmatprep.subr.mxu0 0.0
        %1089 = vmatpush1.msra.mxu0 0.0
        %1090 = vmatprep.subr.mxu0 0.0
        %1091 = vmatpush1.msra.mxu0 0.0
        %1092 = vmatprep.subr.mxu0 0.0
        %1093 = vmatpush1.msra.mxu0 0.0
        %1094 = vmatprep.subr.mxu0 0.0
        %1095 = vmatpush1.msra.mxu0 0.0
        %1096 = vmatprep.subr.mxu0 0.0
        %1097 = vmatpush1.msra.mxu0 0.0
        %1098 = vmatprep.subr.mxu0 0.0
        %1099 = vmatpush1.msra.mxu0 0.0
        %1100 = vmatprep.subr.mxu0 0.0
        %1101 = vmatpush1.msra.mxu0 0.0
        %1102 = vmatprep.subr.mxu0 0.0
        %1103 = vmatpush1.msra.mxu0 0.0
        %1104 = vmatprep.subr.mxu0 0.0
        %1105 = vmatpush1.msra.mxu0 0.0
        %1106 = vmatprep.subr.mxu0 0.0
        %1107 = vmatpush1.msra.mxu0 0.0
        %1108 = vmatprep.subr.mxu0 0.0
        %1109 = vmatpush1.msra.mxu0 0.0
        %1110 = vmatprep.subr.mxu0 0.0
        %1111 = vmatpush1.msra.mxu0 0.0
        %1112 = vmatprep.subr.mxu0 0.0
        %1113 = vmatpush1.msra.mxu0 0.0
        %1114 = vmatprep.subr.mxu0 0.0
        %1115 = vmatpush1.msra.mxu0 0.0
        %1116 = vmatprep.subr.mxu0 0.0
        %1117 = vmatpush1.msra.mxu0 0.0
        %1118 = vmatprep.subr.mxu0 0.0
        %1119 = vmatpush1.msra.mxu0 0.0
        %1120 = vmatprep.subr.mxu0 0.0
        %1121 = vmatpush1.msra.mxu0 0.0
        %1122 = vmatprep.subr.mxu0 0.0
        %1123 = vmatpush1.msra.mxu0 0.0
        %1124 = vmatprep.subr.mxu0 0.0
        %1125 = vmatpush1.msra.mxu0 0.0
        %1126 = vmatprep.subr.mxu0 0.0
        %1127 = vmatpush1.msra.mxu0 0.0
        %1128 = vmatprep.subr.mxu0 0.0
        %1129 = vmatpush1.msra.mxu0 0.0
        %1130 = vmatprep.subr.mxu0 0.0
        %1131 = vmatpush1.msra.mxu0 0.0
        %1132 = vmatprep.subr.mxu0 0.0
        %1133 = vmatpush1.msra.mxu0 0.0
        %1134 = vmatprep.subr.mxu0 0.0
        %1135 = vmatpush1.msra.mxu0 0.0
        %1136 = vmatprep.subr.mxu0 0.0
        %1137 = vmatpush1.msra.mxu0 0.0
        %1138 = vmatprep.subr.mxu0 0.0
        %1139 = vmatpush1.msra.mxu0 0.0
        %1140 = vmatprep.mubr.f32.mxu0 0.0
        %1141 = vmatmul.mubr.f32.gmra.mrb[0].mxu0 %v1074
        %v1142 = vpop.f32.mrb[0].mxu0
        %v1143 = vadd.f32 0.0, %v1142
        %v1144 = vpop.f32.mrb[0].mxu0
        %1145 = vdwg.mxu0
        %1146 = vrot.lane.b32.xlu0 %v638, 64
        %v1147 = vpop.permute.xlu0 %1146
        %v1150 = vsel %vm643, %v991, 0
        %1152 = vmatprep.subr.mxu0 0.0
        %1153 = vmatpush1.msra.mxu0 %v1147
        %1154 = vmatprep.subr.mxu0 0.0
        %1155 = vmatpush1.msra.mxu0 0.0
        %1156 = vmatprep.subr.mxu0 0.0
        %1157 = vmatpush1.msra.mxu0 0.0
        %1158 = vmatprep.subr.mxu0 0.0
        %1159 = vmatpush1.msra.mxu0 0.0
        %1160 = vmatprep.subr.mxu0 0.0
        %1161 = vmatpush1.msra.mxu0 0.0
        %1162 = vmatprep.subr.mxu0 0.0
        %1163 = vmatpush1.msra.mxu0 0.0
        %1164 = vmatprep.subr.mxu0 0.0
        %1165 = vmatpush1.msra.mxu0 0.0
        %1166 = vmatprep.subr.mxu0 0.0
        %1167 = vmatpush1.msra.mxu0 0.0
        %1168 = vmatprep.subr.mxu0 0.0
        %1169 = vmatpush1.msra.mxu0 0.0
        %1170 = vmatprep.subr.mxu0 0.0
        %1171 = vmatpush1.msra.mxu0 0.0
        %1172 = vmatprep.subr.mxu0 0.0
        %1173 = vmatpush1.msra.mxu0 0.0
        %1174 = vmatprep.subr.mxu0 0.0
        %1175 = vmatpush1.msra.mxu0 0.0
        %1176 = vmatprep.subr.mxu0 0.0
        %1177 = vmatpush1.msra.mxu0 0.0
        %1178 = vmatprep.subr.mxu0 0.0
        %1179 = vmatpush1.msra.mxu0 0.0
        %1180 = vmatprep.subr.mxu0 0.0
        %1181 = vmatpush1.msra.mxu0 0.0
        %1182 = vmatprep.subr.mxu0 0.0
        %1183 = vmatpush1.msra.mxu0 0.0
        %1184 = vmatprep.subr.mxu0 0.0
        %1185 = vmatpush1.msra.mxu0 0.0
        %1186 = vmatprep.subr.mxu0 0.0
        %1187 = vmatpush1.msra.mxu0 0.0
        %1188 = vmatprep.subr.mxu0 0.0
        %1189 = vmatpush1.msra.mxu0 0.0
        %1190 = vmatprep.subr.mxu0 0.0
        %1191 = vmatpush1.msra.mxu0 0.0
        %1192 = vmatprep.subr.mxu0 0.0
        %1193 = vmatpush1.msra.mxu0 0.0
        %1194 = vmatprep.subr.mxu0 0.0
        %1195 = vmatpush1.msra.mxu0 0.0
        %1196 = vmatprep.subr.mxu0 0.0
        %1197 = vmatpush1.msra.mxu0 0.0
        %1198 = vmatprep.subr.mxu0 0.0
        %1199 = vmatpush1.msra.mxu0 0.0
        %1200 = vmatprep.subr.mxu0 0.0
        %1201 = vmatpush1.msra.mxu0 0.0
        %1202 = vmatprep.subr.mxu0 0.0
        %1203 = vmatpush1.msra.mxu0 0.0
        %1204 = vmatprep.subr.mxu0 0.0
        %1205 = vmatpush1.msra.mxu0 0.0
        %1206 = vmatprep.subr.mxu0 0.0
        %1207 = vmatpush1.msra.mxu0 0.0
        %1208 = vmatprep.subr.mxu0 0.0
        %1209 = vmatpush1.msra.mxu0 0.0
        %1210 = vmatprep.subr.mxu0 0.0
        %1211 = vmatpush1.msra.mxu0 0.0
        %1212 = vmatprep.subr.mxu0 0.0
        %1213 = vmatpush1.msra.mxu0 0.0
        %1214 = vmatprep.subr.mxu0 0.0
        %1215 = vmatpush1.msra.mxu0 0.0
        %1216 = vmatprep.mubr.f32.mxu0 0.0
        %1217 = vmatmul.mubr.f32.gmra.mrb[0].mxu0 %v1150
        %v1218 = vpop.f32.mrb[0].mxu0
        %v1219 = vadd.f32 0.0, %v1218
        %v1220 = vpop.f32.mrb[0].mxu0
        %1221 = vdwg.mxu0
        %1222 = vrot.lane.b32.xlu0 %v640, 64
        %v1223 = vpop.permute.xlu0 %1222
        %v1226 = vsel %vm643, %v993, 0
        %1228 = vmatprep.subr.mxu0 0.0
        %1229 = vmatpush1.msra.mxu0 %v1223
        %1230 = vmatprep.subr.mxu0 0.0
        %1231 = vmatpush1.msra.mxu0 0.0
        %1232 = vmatprep.subr.mxu0 0.0
        %1233 = vmatpush1.msra.mxu0 0.0
        %1234 = vmatprep.subr.mxu0 0.0
        %1235 = vmatpush1.msra.mxu0 0.0
        %1236 = vmatprep.subr.mxu0 0.0
        %1237 = vmatpush1.msra.mxu0 0.0
        %1238 = vmatprep.subr.mxu0 0.0
        %1239 = vmatpush1.msra.mxu0 0.0
        %1240 = vmatprep.subr.mxu0 0.0
        %1241 = vmatpush1.msra.mxu0 0.0
        %1242 = vmatprep.subr.mxu0 0.0
        %1243 = vmatpush1.msra.mxu0 0.0
        %1244 = vmatprep.subr.mxu0 0.0
        %1245 = vmatpush1.msra.mxu0 0.0
        %1246 = vmatprep.subr.mxu0 0.0
        %1247 = vmatpush1.msra.mxu0 0.0
        %1248 = vmatprep.subr.mxu0 0.0
        %1249 = vmatpush1.msra.mxu0 0.0
        %1250 = vmatprep.subr.mxu0 0.0
        %1251 = vmatpush1.msra.mxu0 0.0
        %1252 = vmatprep.subr.mxu0 0.0
        %1253 = vmatpush1.msra.mxu0 0.0
        %1254 = vmatprep.subr.mxu0 0.0
        %1255 = vmatpush1.msra.mxu0 0.0
        %1256 = vmatprep.subr.mxu0 0.0
        %1257 = vmatpush1.msra.mxu0 0.0
        %1258 = vmatprep.subr.mxu0 0.0
        %1259 = vmatpush1.msra.mxu0 0.0
        %1260 = vmatprep.subr.mxu0 0.0
        %1261 = vmatpush1.msra.mxu0 0.0
        %1262 = vmatprep.subr.mxu0 0.0
        %1263 = vmatpush1.msra.mxu0 0.0
        %1264 = vmatprep.subr.mxu0 0.0
        %1265 = vmatpush1.msra.mxu0 0.0
        %1266 = vmatprep.subr.mxu0 0.0
        %1267 = vmatpush1.msra.mxu0 0.0
        %1268 = vmatprep.subr.mxu0 0.0
        %1269 = vmatpush1.msra.mxu0 0.0
        %1270 = vmatprep.subr.mxu0 0.0
        %1271 = vmatpush1.msra.mxu0 0.0
        %1272 = vmatprep.subr.mxu0 0.0
        %1273 = vmatpush1.msra.mxu0 0.0
        %1274 = vmatprep.subr.mxu0 0.0
        %1275 = vmatpush1.msra.mxu0 0.0
        %1276 = vmatprep.subr.mxu0 0.0
        %1277 = vmatpush1.msra.mxu0 0.0
        %1278 = vmatprep.subr.mxu0 0.0
        %1279 = vmatpush1.msra.mxu0 0.0
        %1280 = vmatprep.subr.mxu0 0.0
        %1281 = vmatpush1.msra.mxu0 0.0
        %1282 = vmatprep.subr.mxu0 0.0
        %1283 = vmatpush1.msra.mxu0 0.0
        %1284 = vmatprep.subr.mxu0 0.0
        %1285 = vmatpush1.msra.mxu0 0.0
        %1286 = vmatprep.subr.mxu0 0.0
        %1287 = vmatpush1.msra.mxu0 0.0
        %1288 = vmatprep.subr.mxu0 0.0
        %1289 = vmatpush1.msra.mxu0 0.0
        %1290 = vmatprep.subr.mxu0 0.0
        %1291 = vmatpush1.msra.mxu0 0.0
        %1292 = vmatprep.mubr.f32.mxu0 0.0
        %1293 = vmatmul.mubr.f32.gmra.mrb[0].mxu0 %v1226
        %v1294 = vpop.f32.mrb[0].mxu0
        %v1295 = vadd.f32 0.0, %v1294
        %v1296 = vpop.f32.mrb[0].mxu0
        %1297 = vdwg.mxu0
        %1299 = vrot.lane.b32.xlu0 %v1143, 8
        %v1300 = vpop.permute.xlu0 %1299
        %1303 = vrot.lane.b32.xlu0 %v1219, 16
        %v1304 = vpop.permute.xlu0 %1303
        %1307 = vrot.lane.b32.xlu0 %v1295, 24
        %v1308 = vpop.permute.xlu0 %1307
        %v1310 = vsel %vm643, %v1067, %v1300
        %vm1311 = vcmask 130048
        %v1312 = vsel %vm1311, %v1310, %v1304
        %vm1313 = vcmask 195584
        %v1314 = vsel %vm1313, %v1312, %v1308
        %v1315 = vld [vmem:[%s5] sm:$0xff]
        %v1316 = vld [vmem:[%s5 + $0x8] sm:$0xff]
        %v1317 = vld [vmem:[%s5 + $0x10] sm:$0xff]
        %v1318 = vld [vmem:[%s5 + $0x18] sm:$0xff]
        %v1319 = vld [vmem:[%s6] sm:$0x1]
        %v1321 = vlaneseq
        %v1322 = vshrl.u32 %v1321, 7
        %v1323 = vsub.s32 0, %v1322
        %v1324 = vrot.slane %v1319, %v1323
        %v1327 = vsel %vm477, %v1314, 0
        %v1330 = vsel %vm477, %v1315, 0
        %v1333 = vsel %vm477, %v1316, 0
        %v1336 = vsel %vm477, %v1317, 0
        %v1339 = vsel %vm477, %v1318, 0
        %1341 = vmatprep.subr.mxu0 0.0
        %1342 = vmatpush1.xpose.msra.mxu0 %v1330
        %1343 = vmatprep.subr.mxu0 0.0
        %1344 = vmatpush1.xpose.msra.mxu0 %v1333
        %1345 = vmatprep.subr.mxu0 0.0
        %1346 = vmatpush1.xpose.msra.mxu0 %v1336
        %1347 = vmatprep.subr.mxu0 0.0
        %1348 = vmatpush1.xpose.msra.mxu0 %v1339
        %1349 = vmatprep.subr.mxu0 0.0
        %1350 = vmatpush1.xpose.msra.mxu0 0.0
        %1351 = vmatprep.subr.mxu0 0.0
        %1352 = vmatpush1.xpose.msra.mxu0 0.0
        %1353 = vmatprep.subr.mxu0 0.0
        %1354 = vmatpush1.xpose.msra.mxu0 0.0
        %1355 = vmatprep.subr.mxu0 0.0
        %1356 = vmatpush1.xpose.msra.mxu0 0.0
        %1357 = vmatprep.subr.mxu0 0.0
        %1358 = vmatpush1.xpose.msra.mxu0 0.0
        %1359 = vmatprep.subr.mxu0 0.0
        %1360 = vmatpush1.xpose.msra.mxu0 0.0
        %1361 = vmatprep.subr.mxu0 0.0
        %1362 = vmatpush1.xpose.msra.mxu0 0.0
        %1363 = vmatprep.subr.mxu0 0.0
        %1364 = vmatpush1.xpose.msra.mxu0 0.0
        %1365 = vmatprep.subr.mxu0 0.0
        %1366 = vmatpush1.xpose.msra.mxu0 0.0
        %1367 = vmatprep.subr.mxu0 0.0
        %1368 = vmatpush1.xpose.msra.mxu0 0.0
        %1369 = vmatprep.subr.mxu0 0.0
        %1370 = vmatpush1.xpose.msra.mxu0 0.0
        %1371 = vmatprep.subr.mxu0 0.0
        %1372 = vmatpush1.xpose.msra.mxu0 0.0
        %1373 = vmatprep.subr.mxu0 0.0
        %1374 = vmatpush1.xpose.msra.mxu0 0.0
        %1375 = vmatprep.subr.mxu0 0.0
        %1376 = vmatpush1.xpose.msra.mxu0 0.0
        %1377 = vmatprep.subr.mxu0 0.0
        %1378 = vmatpush1.xpose.msra.mxu0 0.0
        %1379 = vmatprep.subr.mxu0 0.0
        %1380 = vmatpush1.xpose.msra.mxu0 0.0
        %1381 = vmatprep.subr.mxu0 0.0
        %1382 = vmatpush1.xpose.msra.mxu0 0.0
        %1383 = vmatprep.subr.mxu0 0.0
        %1384 = vmatpush1.xpose.msra.mxu0 0.0
        %1385 = vmatprep.subr.mxu0 0.0
        %1386 = vmatpush1.xpose.msra.mxu0 0.0
        %1387 = vmatprep.subr.mxu0 0.0
        %1388 = vmatpush1.xpose.msra.mxu0 0.0
        %1389 = vmatprep.subr.mxu0 0.0
        %1390 = vmatpush1.xpose.msra.mxu0 0.0
        %1391 = vmatprep.subr.mxu0 0.0
        %1392 = vmatpush1.xpose.msra.mxu0 0.0
        %1393 = vmatprep.subr.mxu0 0.0
        %1394 = vmatpush1.xpose.msra.mxu0 0.0
        %1395 = vmatprep.subr.mxu0 0.0
        %1396 = vmatpush1.xpose.msra.mxu0 0.0
        %1397 = vmatprep.subr.mxu0 0.0
        %1398 = vmatpush1.xpose.msra.mxu0 0.0
        %1399 = vmatprep.subr.mxu0 0.0
        %1400 = vmatpush1.xpose.msra.mxu0 0.0
        %1401 = vmatprep.subr.mxu0 0.0
        %1402 = vmatpush1.xpose.msra.mxu0 0.0
        %1403 = vmatprep.subr.mxu0 0.0
        %1404 = vmatpush1.xpose.msra.mxu0 0.0
        %1405 = vmatprep.mubr.f32.mxu0 0.0
        %1406 = vmatmul.mubr.f32.gmra.mrb[0].mxu0 %v1327
        %v1407 = vpop.f32.mrb[0].mxu0
        %v1408 = vadd.f32 %v1324, %v1407
        %v1409 = vpop.f32.mrb[0].mxu0
        %1410 = vdwg.mxu0
        %v1411 = vadd.f32 %v474, %v1408
        %v1412 = vld [vmem:[%s7] sm:$0x1]
        %v1413 = vld [vmem:[%s8] sm:$0x1]
        %v1414 = vsel %vm477, %v1411, 0.0
        %1415 = vadd.xlane.f32.xlu0 %v1414
        %v1416 = vpop.xlane.xlu0 %1415
        %v1417 = vmul.f32 %v1416, %v481
        %v1418 = vsub.f32 %v1411, %v1417
        %v1419 = vmul.f32 %v1418, %v1418
        %v1420 = vsel %vm477, %v1419, 0.0
        %1421 = vadd.xlane.f32.xlu0 %v1420
        %v1422 = vpop.xlane.xlu0 %1421
        %v1423 = vmul.f32 %v1422, %v481
        %v1424 = vadd.f32 %v1423, 1e-05
        %v1425 = vrsqrt.pop %v1424
        %v1426 = vmul.f32 %v1418, %v1425
        %v1428 = vlaneseq
        %v1429 = vshrl.u32 %v1428, 7
        %v1430 = vsub.s32 0, %v1429
        %v1431 = vrot.slane %v1412, %v1430
        %v1433 = vmul.f32 %v1426, %v1431
        %v1435 = vlaneseq
        %v1436 = vshrl.u32 %v1435, 7
        %v1437 = vsub.s32 0, %v1436
        %v1438 = vrot.slane %v1413, %v1437
        %v1440 = vadd.f32 %v1433, %v1438
        %v1441 = vld [vmem:[%s9] sm:$0xff]
        %v1442 = vld [vmem:[%s9 + $0x8] sm:$0xff]
        %v1443 = vld [vmem:[%s9 + $0x10] sm:$0xff]
        %v1444 = vld [vmem:[%s9 + $0x18] sm:$0xff]
        %v1445 = vld [vmem:[%s9 + $0x20] sm:$0xff]
        %v1446 = vld [vmem:[%s9 + $0x28] sm:$0xff]
        %v1447 = vld [vmem:[%s9 + $0x30] sm:$0xff]
        %v1448 = vld [vmem:[%s9 + $0x38] sm:$0xff]
        %v1449 = vld [vmem:[%s9 + $0x40] sm:$0xff]
        %v1450 = vld [vmem:[%s9 + $0x48] sm:$0xff]
        %v1451 = vld [vmem:[%s9 + $0x50] sm:$0xff]
        %v1452 = vld [vmem:[%s9 + $0x58] sm:$0xff]
        %v1453 = vld [vmem:[%s9 + $0x60] sm:$0xff]
        %v1454 = vld [vmem:[%s9 + $0x68] sm:$0xff]
        %v1455 = vld [vmem:[%s9 + $0x70] sm:$0xff]
        %v1456 = vld [vmem:[%s9 + $0x78] sm:$0xff]
        %v1457 = vld [vmem:[%s10] sm:$0x1]
        %v1459 = vlaneseq
        %v1460 = vshrl.u32 %v1459, 7
        %v1461 = vsub.s32 0, %v1460
        %v1462 = vrot.slane %v1457, %v1461
        %v1465 = vsel %vm477, %v1440, 0
        %v1468 = vsel %vm477, %v1441, 0
        %v1471 = vsel %vm477, %v1442, 0
        %v1474 = vsel %vm477, %v1443, 0
        %v1477 = vsel %vm477, %v1444, 0
        %v1480 = vsel %vm477, %v1445, 0
        %v1483 = vsel %vm477, %v1446, 0
        %v1486 = vsel %vm477, %v1447, 0
        %v1489 = vsel %vm477, %v1448, 0
        %v1492 = vsel %vm477, %v1449, 0
        %v1495 = vsel %vm477, %v1450, 0
        %v1498 = vsel %vm477, %v1451, 0
        %v1501 = vsel %vm477, %v1452, 0
        %v1504 = vsel %vm477, %v1453, 0
        %v1507 = vsel %vm477, %v1454, 0
        %v1510 = vsel %vm477, %v1455, 0
        %v1513 = vsel %vm477, %v1456, 0
        %1515 = vmatprep.subr.mxu0 0.0
        %1516 = vmatpush1.xpose.msra.mxu0 %v1468
        %1517 = vmatprep.subr.mxu0 0.0
        %1518 = vmatpush1.xpose.msra.mxu0 %v1471
        %1519 = vmatprep.subr.mxu0 0.0
        %1520 = vmatpush1.xpose.msra.mxu0 %v1474
        %1521 = vmatprep.subr.mxu0 0.0
        %1522 = vmatpush1.xpose.msra.mxu0 %v1477
        %1523 = vmatprep.subr.mxu0 0.0
        %1524 = vmatpush1.xpose.msra.mxu0 %v1480
        %1525 = vmatprep.subr.mxu0 0.0
        %1526 = vmatpush1.xpose.msra.mxu0 %v1483
        %1527 = vmatprep.subr.mxu0 0.0
        %1528 = vmatpush1.xpose.msra.mxu0 %v1486
        %1529 = vmatprep.subr.mxu0 0.0
        %1530 = vmatpush1.xpose.msra.mxu0 %v1489
        %1531 = vmatprep.subr.mxu0 0.0
        %1532 = vmatpush1.xpose.msra.mxu0 %v1492
        %1533 = vmatprep.subr.mxu0 0.0
        %1534 = vmatpush1.xpose.msra.mxu0 %v1495
        %1535 = vmatprep.subr.mxu0 0.0
        %1536 = vmatpush1.xpose.msra.mxu0 %v1498
        %1537 = vmatprep.subr.mxu0 0.0
        %1538 = vmatpush1.xpose.msra.mxu0 %v1501
        %1539 = vmatprep.subr.mxu0 0.0
        %1540 = vmatpush1.xpose.msra.mxu0 %v1504
        %1541 = vmatprep.subr.mxu0 0.0
        %1542 = vmatpush1.xpose.msra.mxu0 %v1507
        %1543 = vmatprep.subr.mxu0 0.0
        %1544 = vmatpush1.xpose.msra.mxu0 %v1510
        %1545 = vmatprep.subr.mxu0 0.0
        %1546 = vmatpush1.xpose.msra.mxu0 %v1513
        %1547 = vmatprep.subr.mxu0 0.0
        %1548 = vmatpush1.xpose.msra.mxu0 0.0
        %1549 = vmatprep.subr.mxu0 0.0
        %1550 = vmatpush1.xpose.msra.mxu0 0.0
        %1551 = vmatprep.subr.mxu0 0.0
        %1552 = vmatpush1.xpose.msra.mxu0 0.0
        %1553 = vmatprep.subr.mxu0 0.0
        %1554 = vmatpush1.xpose.msra.mxu0 0.0
        %1555 = vmatprep.subr.mxu0 0.0
        %1556 = vmatpush1.xpose.msra.mxu0 0.0
        %1557 = vmatprep.subr.mxu0 0.0
        %1558 = vmatpush1.xpose.msra.mxu0 0.0
        %1559 = vmatprep.subr.mxu0 0.0
        %1560 = vmatpush1.xpose.msra.mxu0 0.0
        %1561 = vmatprep.subr.mxu0 0.0
        %1562 = vmatpush1.xpose.msra.mxu0 0.0
        %1563 = vmatprep.subr.mxu0 0.0
        %1564 = vmatpush1.xpose.msra.mxu0 0.0
        %1565 = vmatprep.subr.mxu0 0.0
        %1566 = vmatpush1.xpose.msra.mxu0 0.0
        %1567 = vmatprep.subr.mxu0 0.0
        %1568 = vmatpush1.xpose.msra.mxu0 0.0
        %1569 = vmatprep.subr.mxu0 0.0
        %1570 = vmatpush1.xpose.msra.mxu0 0.0
        %1571 = vmatprep.subr.mxu0 0.0
        %1572 = vmatpush1.xpose.msra.mxu0 0.0
        %1573 = vmatprep.subr.mxu0 0.0
        %1574 = vmatpush1.xpose.msra.mxu0 0.0
        %1575 = vmatprep.subr.mxu0 0.0
        %1576 = vmatpush1.xpose.msra.mxu0 0.0
        %1577 = vmatprep.subr.mxu0 0.0
        %1578 = vmatpush1.xpose.msra.mxu0 0.0
        %1579 = vmatprep.mubr.f32.mxu0 0.0
        %1580 = vmatmul.mubr.f32.gmra.mrb[0].mxu0 %v1465
        %v1581 = vpop.f32.mrb[0].mxu0
        %v1582 = vadd.f32 %v1462, %v1581
        %v1583 = vpop.f32.mrb[0].mxu0
        %1584 = vdwg.mxu0
        %v1585 = vmul.f32 %v1582, 1.702
        %v1586 = vxor.u32 %v1585, 2147483648
        %v1587 = vmul.f32 %v1586, 1.442695
        %v1588 = vpow.pop %v1587
        %v1589 = vadd.f32 %v1588, 1.0
        %v1590 = vrcp.pop %v1589
        %v1591 = vmul.f32 1.0, %v1590
        %v1592 = vmul.f32 %v1582, %v1591
        %v1593 = vld [vmem:[%s11] sm:$0xff]
        %v1594 = vld [vmem:[%s11 + $0x8] sm:$0xff]
        %v1595 = vld [vmem:[%s11 + $0x10] sm:$0xff]
        %v1596 = vld [vmem:[%s11 + $0x18] sm:$0xff]
        %v1597 = vld [vmem:[%s12] sm:$0x1]
        %v1599 = vlaneseq
        %v1600 = vshrl.u32 %v1599, 7
        %v1601 = vsub.s32 0, %v1600
        %v1602 = vrot.slane %v1597, %v1601
        %1604 = vmatprep.subr.mxu0 0.0
        %1605 = vmatpush1.xpose.msra.mxu0 %v1593
        %1606 = vmatprep.subr.mxu0 0.0
        %1607 = vmatpush1.xpose.msra.mxu0 %v1594
        %1608 = vmatprep.subr.mxu0 0.0
        %1609 = vmatpush1.xpose.msra.mxu0 %v1595
        %1610 = vmatprep.subr.mxu0 0.0
        %1611 = vmatpush1.xpose.msra.mxu0 %v1596
        %1612 = vmatprep.subr.mxu0 0.0
        %1613 = vmatpush1.xpose.msra.mxu0 0.0
        %1614 = vmatprep.subr.mxu0 0.0
        %1615 = vmatpush1.xpose.msra.mxu0 0.0
        %1616 = vmatprep.subr.mxu0 0.0
        %1617 = vmatpush1.xpose.msra.mxu0 0.0
        %1618 = vmatprep.subr.mxu0 0.0
        %1619 = vmatpush1.xpose.msra.mxu0 0.0
        %1620 = vmatprep.subr.mxu0 0.0
        %1621 = vmatpush1.xpose.msra.mxu0 0.0
        %1622 = vmatprep.subr.mxu0 0.0
        %1623 = vmatpush1.xpose.msra.mxu0 0.0
        %1624 = vmatprep.subr.mxu0 0.0
        %1625 = vmatpush1.xpose.msra.mxu0 0.0
        %1626 = vmatprep.subr.mxu0 0.0
        %1627 = vmatpush1.xpose.msra.mxu0 0.0
        %1628 = vmatprep.subr.mxu0 0.0
        %1629 = vmatpush1.xpose.msra.mxu0 0.0
        %1630 = vmatprep.subr.mxu0 0.0
        %1631 = vmatpush1.xpose.msra.mxu0 0.0
        %1632 = vmatprep.subr.mxu0 0.0
        %1633 = vmatpush1.xpose.msra.mxu0 0.0
        %1634 = vmatprep.subr.mxu0 0.0
        %1635 = vmatpush1.xpose.msra.mxu0 0.0
        %1636 = vmatprep.subr.mxu0 0.0
        %1637 = vmatpush1.xpose.msra.mxu0 0.0
        %1638 = vmatprep.subr.mxu0 0.0
        %1639 = vmatpush1.xpose.msra.mxu0 0.0
        %1640 = vmatprep.subr.mxu0 0.0
        %1641 = vmatpush1.xpose.msra.mxu0 0.0
        %1642 = vmatprep.subr.mxu0 0.0
        %1643 = vmatpush1.xpose.msra.mxu0 0.0
        %1644 = vmatprep.subr.mxu0 0.0
        %1645 = vmatpush1.xpose.msra.mxu0 0.0
        %1646 = vmatprep.subr.mxu0 0.0
        %1647 = vmatpush1.xpose.msra.mxu0 0.0
        %1648 = vmatprep.subr.mxu0 0.0
        %1649 = vmatpush1.xpose.msra.mxu0 0.0
        %1650 = vmatprep.subr.mxu0 0.0
        %1651 = vmatpush1.xpose.msra.mxu0 0.0
        %1652 = vmatprep.subr.mxu0 0.0
        %1653 = vmatpush1.xpose.msra.mxu0 0.0
        %1654 = vmatprep.subr.mxu0 0.0
        %1655 = vmatpush1.xpose.msra.mxu0 0.0
        %1656 = vmatprep.subr.mxu0 0.0
        %1657 = vmatpush1.xpose.msra.mxu0 0.0
        %1658 = vmatprep.subr.mxu0 0.0
        %1659 = vmatpush1.xpose.msra.mxu0 0.0
        %1660 = vmatprep.subr.mxu0 0.0
        %1661 = vmatpush1.xpose.msra.mxu0 0.0
        %1662 = vmatprep.subr.mxu0 0.0
        %1663 = vmatpush1.xpose.msra.mxu0 0.0
        %1664 = vmatprep.subr.mxu0 0.0
        %1665 = vmatpush1.xpose.msra.mxu0 0.0
        %1666 = vmatprep.subr.mxu0 0.0
        %1667 = vmatpush1.xpose.msra.mxu0 0.0
        %1668 = vmatprep.mubr.f32.mxu0 0.0
        %1669 = vmatmul.mubr.f32.gmra.mrb[0].mxu0 %v1592
        %v1670 = vpop.f32.mrb[0].mxu0
        %v1671 = vadd.f32 %v1602, %v1670
        %v1672 = vpop.f32.mrb[0].mxu0
        %1673 = vdwg.mxu0
        %v1674 = vadd.f32 %v1411, %v1671
        %1675 = vst.msk [vmem:[%s473] sm:$0xff] %vm477, %v1674
        %v1676 = vsel %vm643, %v987, 0.0
        %v1677 = vsel %vm643, %v989, 0.0
        %v1678 = vadd.f32 %v1676, %v1677
        %v1679 = vsel %vm643, %v991, 0.0
        %v1680 = vadd.f32 %v1678, %v1679
        %v1681 = vsel %vm643, %v993, 0.0
        %v1682 = vadd.f32 %v1680, %v1681
        %v1683 = vrcp.pop 4.0
        %v1684 = vmul.f32 %v1682, %v1683
        %1685 = vst.msk [vmem:[%s465] sm:$0xff] %vm643, %v1684
        %p1686 = scmp.lt.s32.totalorder %s29, 1
        %s1687 = scalar_select %p1686, %s29, 1
        %s1688 = smul.addr %s1687, 8
        %s1689 = scalar_lea.vmem %s13, %s1688
        %s1690 = sand.u32 %s341, 1
        %s1691 = scalar_lea.sflag [#allocation3], %s1690
        %s1692 = sand.u32 %s341, 1
        %s1693 = smul.addr %s1692, 8
        %s1694 = scalar_lea.vmem [#allocation2], %s1693
        // Predicated region
        $region73: #{residual_attention_block.1} parent=71 // pred_check
          %p1695 = pneg %p325
        $region74: #{residual_attention_block.1} parent=71 // pred_check_branch
          %1697 = sbr.rel (%p1695) target = $region76
        $region75: #{residual_attention_block.1} parent=71 // pred_region
          _
        $region76: #{residual_attention_block.1} parent=71 // pred_fallthru
          _
        // Predicated region
        $region77: #{residual_attention_block.1} parent=71 // pred_check
          %p1698 = pneg %p351
        $region78: #{residual_attention_block.1} parent=71 // pred_check_branch
          %1700 = sbr.rel (%p1698) target = $region80
        $region79: #{residual_attention_block.1} parent=71 // pred_region
          %s1702 = ssub.s32 128, 128
          %1703 = vsyncadd %s1691, %s1702
          %s1704 = smul.addr %s29, 128
          %s1705 = scalar_lea.hbm %s14, %s1704
          %s1707 = sshll.u32 %s1694, 4
          %s1708 = int_to_ptr.vmem [resolvable:$true] %s1707
          %1710 = dma.vmem_to_hbm [thread:$0]  %s1708, 128, %s1705, %s1691
        $region80: #{residual_attention_block.1} parent=71 // pred_fallthru
          _
      $region72: #{residual_attention_block.1} parent=5 // pred_fallthru
        _
      %p1711 = scmp.le.s32.totalorder 2, %s24
      // Predicated region
      $region81: #{residual_attention_block.1} parent=5 // pred_check
        %p1712 = pneg %p1711
      $region82: #{residual_attention_block.1} parent=5 // pred_check_branch
        %1714 = sbr.rel (%p1712) target = $region84
      $region83: #{residual_attention_block.1} parent=5 // pred_region
        %s1715 = ssub.s32 %s24, 2
        // Predicated region
        $region85: #{residual_attention_block.1} parent=83 // pred_check
          %p1716 = pneg %p331
        $region86: #{residual_attention_block.1} parent=83 // pred_check_branch
          %1718 = sbr.rel (%p1716) target = $region88
        $region87: #{residual_attention_block.1} parent=83 // pred_region
          %p1719 = scmp.lt.s32.totalorder %s30, 1
          %s1720 = scalar_select %p1719, %s30, 1
          %s1721 = smul.addr %s1720, 8
          %s1722 = scalar_lea.vmem %s13, %s1721
        $region88: #{residual_attention_block.1} parent=83 // pred_fallthru
          _
        // Predicated region
        $region89: #{residual_attention_block.1} parent=83 // pred_check
          %p1723 = pneg %p357
        $region90: #{residual_attention_block.1} parent=83 // pred_check_branch
          %1725 = sbr.rel (%p1723) target = $region92
        $region91: #{residual_attention_block.1} parent=83 // pred_region
          %s1726 = sand.u32 %s342, 1
          %s1727 = scalar_lea.sflag [#allocation3], %s1726
          %s1728 = sand.u32 %s342, 1
          %s1729 = smul.addr %s1728, 8
          %s1730 = scalar_lea.vmem [#allocation2], %s1729
          %1731 = dma.done %s1727, 128
        $region92: #{residual_attention_block.1} parent=83 // pred_fallthru
          _
      $region84: #{residual_attention_block.1} parent=5 // pred_fallthru
        _
    $region6: #{residual_attention_block.1} parent=1 // loop_footer
      %s28 = sadd.s32 1, %s24
    $region7: #{residual_attention_block.1} parent=1 // loop_footer_branch
      %23 = sbr.rel target = $region3
    $region8: #{residual_attention_block.1} parent=1 // loop_exit
      _
    %1732 = vsyncpa [#allocation3], 1
    %s1733 = scalar_lea.sflag [#allocation3], 1
    %1734 = vsyncpa %s1733, 1

</llo_original>
